<compile_context>
chip_gen: v7x
topology: tpu7x:2x2x1
jax: 0.10.0
libtpu: 0.0.40
codegen_flags: <defaults>
</compile_context>

<pallas_src>
import jax
import jax.numpy as jnp
from jax.experimental import pallas as pl
from jax.experimental.pallas import tpu as pltpu


# ---------------------------------------------------------------------------
# In-kernel helpers
# ---------------------------------------------------------------------------
def _silu_pair(v):
    """(silu(v), silu(-v)) with one sigmoid: silu(-v) = v*sigmoid(v) - v."""
    p = v * jax.nn.sigmoid(v)
    return p, p - v


def _make_kernel(nr_resnet, cp):
    R, Cp = nr_resnet, cp
    f32 = jnp.float32

    def kernel(u_ref, ul_ref,
               wu1_ref, bu1_ref, wu2_ref, bu2_ref,
               wl1_ref, bl1_ref, wl2_ref, bl2_ref,
               *out_refs):
        ou_refs, oul_refs = out_refs[:R], out_refs[R:]
        mm_dt = wu1_ref.dtype                           # matmul operand dtype

        u = u_ref[0].astype(f32)                        # (Cp, TL), lane-dense
        ul = ul_ref[0].astype(f32)
        # ucat == [silu(u); silu(-u)] stacked on the contraction (sublane) axis
        ucat = jnp.concatenate(_silu_pair(u), axis=0)   # (2Cp, TL)

        for r in range(R):                              # static unroll, small R
            # ---- u_stream[r]: GatedResNet, skip_connection=0 ----------------
            y1 = (jnp.dot(wu1_ref[r], ucat.astype(mm_dt),
                          preferred_element_type=f32) + bu1_ref[r])
            ycat = jnp.concatenate(_silu_pair(y1), axis=0).astype(mm_dt)
            y2 = (jnp.dot(wu2_ref[r], ycat, preferred_element_type=f32)
                  + bu2_ref[r])                         # (2Cp, TL): both halves
            u = u + y2[:Cp] * jax.nn.sigmoid(y2[Cp:])
            ou_refs[r][0] = u.astype(ou_refs[r].dtype)
            ucat = jnp.concatenate(_silu_pair(u), axis=0)   # reused: skip + next layer

            # ---- ul_stream[r]: GatedResNet, skip_connection=1 (a = new u) ----
            lcat = jnp.concatenate(_silu_pair(ul), axis=0)
            zcat = jnp.concatenate([lcat, ucat], axis=0).astype(mm_dt)  # (4Cp, TL)
            z1 = (jnp.dot(wl1_ref[r], zcat, preferred_element_type=f32)
                  + bl1_ref[r])
            z2cat = jnp.concatenate(_silu_pair(z1), axis=0).astype(mm_dt)
            z2 = (jnp.dot(wl2_ref[r], z2cat, preferred_element_type=f32)
                  + bl2_ref[r])
            ul = ul + z2[:Cp] * jax.nn.sigmoid(z2[Cp:])
            oul_refs[r][0] = ul.astype(oul_refs[r].dtype)

    return kernel


# ---------------------------------------------------------------------------
# Trace-time weight packing (channel-padded, ± halves along the K axis,
# both conv_out gate halves along the M axis)
# ---------------------------------------------------------------------------
def _pad_vec(v, n):
    return jnp.pad(v, (0, n - v.shape[0]))


def _pair_block(w_io, C, Cp):
    """(2C, C) (in, out) NiN weight -> (Cp, 2Cp) W so that
       W @ [silu(x_pad); silu(-x_pad)] == padded 1x1-conv of concat_elu(x)."""
    wt = w_io.T                                       # (C_out, 2C_in)
    blk = jnp.zeros((Cp, 2 * Cp), w_io.dtype)
    blk = blk.at[:C, :C].set(wt[:, :C])               # columns for silu(+x)
    blk = blk.at[:C, Cp:Cp + C].set(wt[:, C:])        # columns for silu(-x)
    return blk


def _out_block(w_io, C, Cp):
    """(2C, 2C) conv_out weight -> (2Cp, 2Cp): rows [:Cp] = value half,
       rows [Cp:] = gate half; columns laid out for [silu(y); silu(-y)]."""
    wt = w_io.T                                       # (2C_out, 2C_in)
    blk = jnp.zeros((2 * Cp, 2 * Cp), w_io.dtype)
    blk = blk.at[:C, :C].set(wt[:C, :C])
    blk = blk.at[:C, Cp:Cp + C].set(wt[:C, C:])
    blk = blk.at[Cp:Cp + C, :C].set(wt[C:, :C])
    blk = blk.at[Cp:Cp + C, Cp:Cp + C].set(wt[C:, C:])
    return blk


def _pack_all(u_params, ul_params, C, Cp, w_dtype):
    """Stack per-layer weights over the nr_resnet axis.  Weights in w_dtype,
       biases in f32 with a trailing lane-broadcast dim."""
    f32 = jnp.float32

    def bias_out(p):
        return jnp.concatenate([_pad_vec(p["b_out"][:C], Cp),
                                _pad_vec(p["b_out"][C:], Cp)])

    wu1 = jnp.stack([_pair_block(p["w_in"], C, Cp) for p in u_params])
    wu2 = jnp.stack([_out_block(p["w_out"], C, Cp) for p in u_params])
    bu1 = jnp.stack([_pad_vec(p["b_in"], Cp) for p in u_params])
    bu2 = jnp.stack([bias_out(p) for p in u_params])

    wl1 = jnp.stack([jnp.concatenate([_pair_block(p["w_in"], C, Cp),
                                      _pair_block(p["w_skip"], C, Cp)], axis=1)
                     for p in ul_params])
    wl2 = jnp.stack([_out_block(p["w_out"], C, Cp) for p in ul_params])
    bl1 = jnp.stack([_pad_vec(p["b_in"] + p["b_skip"], Cp) for p in ul_params])
    bl2 = jnp.stack([bias_out(p) for p in ul_params])

    to_w = lambda w: w.astype(w_dtype)
    to_b = lambda b: b.astype(f32)[..., None]          # (R, rows, 1)
    return [to_w(wu1), to_b(bu1), to_w(wu2), to_b(bu2),
            to_w(wl1), to_b(bl1), to_w(wl2), to_b(bl2)]


# ---------------------------------------------------------------------------
# Whole-module wrapper: ONE pallas_call for the entire nr_resnet loop
# ---------------------------------------------------------------------------
def cnn_layer_up(u, ul, u_params, ul_params, *, dtype=None, max_tile=4096,
                 vmem_budget=24 * 1024 * 1024):
    """CNNLayerUp.forward (eval mode, h=None).  Returns (u_list, ul_list).

    `dtype=jnp.bfloat16` stores activations/weights in bf16 (HBM + MXU win on
    v6e/v7x); elementwise math always runs in f32 inside the kernel."""
    assert len(u_params) == len(ul_params) and len(u_params) >= 1
    N, C, H, W = u.shape
    R = len(u_params)
    L = H * W
    out_dtype = u.dtype
    act_dtype = jnp.dtype(dtype) if dtype is not None else jnp.dtype(u.dtype)
    itemsize = act_dtype.itemsize

    # Pad the channel axis ONCE to the sublane packing so vregs are full and
    # the in-kernel sublane concatenations / gate-chunk slices are aligned.
    sub = 16 if itemsize == 2 else 8
    Cp = -(-C // sub) * sub

    packs = _pack_all(u_params, ul_params, C, Cp, act_dtype)
    w_bytes = sum(int(p.size) * p.dtype.itemsize for p in packs)

    # Lane tile: as large as the VMEM budget allows (safe under the 32 MiB
    # scoped default and v7x's 64 MiB with double-buffering), a multiple of
    # 128, and — when H*W is 128-aligned — a divisor of H*W (no pad/slice).
    per_lane = (2 + 2 * R) * 2 * Cp * itemsize         # in/out tiles, x2 buffers
    tl_cap = max(128, (vmem_budget - 2 * w_bytes) // per_lane // 128 * 128)
    tl_cap = min(max_tile, tl_cap)
    if L % 128 == 0:
        tl = min(tl_cap, L)
        while L % tl:
            tl -= 128
        L_pad = L
    else:
        tl = min(tl_cap, -(-L // 128) * 128)
        L_pad = -(-L // tl) * tl

    # v7x megacore: make sure the "parallel" grid has at least 2 iterations.
    if N * (L_pad // tl) < 2 and tl >= 256:
        half = tl // 2 // 128 * 128
        if half >= 128 and L_pad % half == 0:
            tl = half

    def to_ncl(v):                                     # NCHW -> (N, Cp, L_pad)
        v = v.reshape(N, C, L)                         # free reshape, no transpose
        if Cp != C or L_pad != L:                      # only when unaligned
            v = jnp.pad(v, ((0, 0), (0, Cp - C), (0, L_pad - L)))
        return v.astype(act_dtype)

    def act_spec():
        return pl.BlockSpec((1, Cp, tl), lambda n, l: (n, 0, l))

    in_specs = ([act_spec(), act_spec()]
                + [pl.BlockSpec(p.shape, lambda n, l: (0, 0, 0)) for p in packs])
    out_shape = tuple(jax.ShapeDtypeStruct((N, Cp, L_pad), act_dtype)
                      for _ in range(2 * R))
    out_specs = [act_spec() for _ in range(2 * R)]

    outs = pl.pallas_call(
        _make_kernel(R, Cp),
        out_shape=out_shape,
        grid_spec=pltpu.PrefetchScalarGridSpec(
            num_scalar_prefetch=0,
            grid=(N, L_pad // tl),
            in_specs=in_specs,
            out_specs=out_specs,
        ),
        compiler_params=pltpu.CompilerParams(
            dimension_semantics=("parallel", "parallel")),
    )(to_ncl(u), to_ncl(ul), *packs)

    def from_ncl(v):                                   # (N, Cp, L_pad) -> NCHW
        if Cp != C or L_pad != L:
            v = v[:, :C, :L]
        return v.reshape(N, C, H, W).astype(out_dtype)

    u_list = [from_ncl(outs[r]) for r in range(R)]
    ul_list = [from_ncl(outs[R + r]) for r in range(R)]
    return u_list, ul_list


# ---------------------------------------------------------------------------
# Pure-JAX reference (mirrors the PyTorch forward, NCHW)
# ---------------------------------------------------------------------------
def _concat_elu_ref(v):                                # F.silu(cat([x, -x], dim=1))
    u = jnp.concatenate([v, -v], axis=1)
    return u * jax.nn.sigmoid(u)


def _nin_ref(v, w, b):                                 # 1x1 conv, w: (in, out)
    return jnp.einsum("nihw,io->nohw", v, w) + b.reshape(1, -1, 1, 1)


def _gated_resnet_ref(x, p, a=None):
    y1 = _nin_ref(_concat_elu_ref(x), p["w_in"], p["b_in"])
    if a is not None:
        y1 = y1 + _nin_ref(_concat_elu_ref(a), p["w_skip"], p["b_skip"])
    y2 = _nin_ref(_concat_elu_ref(y1), p["w_out"], p["b_out"])
    C = x.shape[1]
    return x + y2[:, :C] * jax.nn.sigmoid(y2[:, C:])


def _cnn_layer_up_ref(u, ul, u_params, ul_params):
    u_list, ul_list = [], []
    for pu, pul in zip(u_params, ul_params):
        u = _gated_resnet_ref(u, pu)
        ul = _gated_resnet_ref(ul, pul, a=u)
        u_list.append(u)
        ul_list.append(ul)
    return u_list, ul_list


# ---------------------------------------------------------------------------
# Demo / self-test
# ---------------------------------------------------------------------------
def _init_gated_params(key, C, with_skip):
    ks = jax.random.split(key, 6)
    p = {
        "w_in":  0.1 * jax.random.normal(ks[0], (2 * C, C), jnp.float32),
        "b_in":  0.1 * jax.random.normal(ks[1], (C,), jnp.float32),
        "w_out": 0.1 * jax.random.normal(ks[2], (2 * C, 2 * C), jnp.float32),
        "b_out": 0.1 * jax.random.normal(ks[3], (2 * C,), jnp.float32),
    }
    if with_skip:
        p["w_skip"] = 0.1 * jax.random.normal(ks[4], (2 * C, C), jnp.float32)
        p["b_skip"] = 0.1 * jax.random.normal(ks[5], (C,), jnp.float32)
    return p


if __name__ == "__main__":
    key = jax.random.PRNGKey(0)
    N, C, H, W = 2, 4, 16, 16        # batch=2, nr_filters=4, spatial=16
    nr_resnet = 2

    k_u, k_ul, k_pu, k_pul = jax.random.split(key, 4)
    u0 = jax.random.normal(k_u, (N, C, H, W), jnp.float32)
    ul0 = jax.random.normal(k_ul, (N, C, H, W), jnp.float32)
    u_params = [_init_gated_params(k, C, False)
                for k in jax.random.split(k_pu, nr_resnet)]
    ul_params = [_init_gated_params(k, C, True)
                 for k in jax.random.split(k_pul, nr_resnet)]

    u_list, ul_list = cnn_layer_up(u0, ul0, u_params, ul_params)
    jax.block_until_ready(u_list + ul_list)

    u_ref, ul_ref = _cnn_layer_up_ref(u0, ul0, u_params, ul_params)
    for got, ref in zip(u_list + ul_list, u_ref + ul_ref):
        assert got.shape == (N, C, H, W)
        err = float(jnp.max(jnp.abs(got - ref)))
        assert jnp.allclose(got, ref, atol=2e-4, rtol=2e-4), err

    # bf16 storage/matmul path (v6e/v7x recommendation): compile + sanity only.
    u_bf, ul_bf = cnn_layer_up(u0, ul0, u_params, ul_params, dtype=jnp.bfloat16)
    jax.block_until_ready(u_bf + ul_bf)
    assert all(bool(jnp.all(jnp.isfinite(t))) for t in u_bf + ul_bf)

    print("KERNEL_OK")
</pallas_src>

<mosaic_0001>
module attributes {stable_mosaic.version = 11 : i64} {
  func.func @kernel(%arg0: i32, %arg1: i32, %arg2: memref<1x8x256xf32, #tpu.memory_space<vmem>>, %arg3: memref<1x8x256xf32, #tpu.memory_space<vmem>>, %arg4: memref<2x8x16xf32, #tpu.memory_space<vmem>>, %arg5: memref<2x8x1xf32, #tpu.memory_space<vmem>>, %arg6: memref<2x16x16xf32, #tpu.memory_space<vmem>>, %arg7: memref<2x16x1xf32, #tpu.memory_space<vmem>>, %arg8: memref<2x8x32xf32, #tpu.memory_space<vmem>>, %arg9: memref<2x8x1xf32, #tpu.memory_space<vmem>>, %arg10: memref<2x16x16xf32, #tpu.memory_space<vmem>>, %arg11: memref<2x16x1xf32, #tpu.memory_space<vmem>>, %arg12: memref<1x8x256xf32, #tpu.memory_space<vmem>>, %arg13: memref<1x8x256xf32, #tpu.memory_space<vmem>>, %arg14: memref<1x8x256xf32, #tpu.memory_space<vmem>>, %arg15: memref<1x8x256xf32, #tpu.memory_space<vmem>>) attributes {dimension_semantics = [#tpu.dimension_semantics<parallel>, #tpu.dimension_semantics<parallel>], iteration_bounds = array<i64: 2, 1>, scalar_prefetch = 0 : i64, scratch_operands = 0 : i64, tpu.core_type = #tpu.core_type<tc>, window_params = [{transform_indices = @transform_0, window_bounds = array<i64: 1, 8, 256>}, {transform_indices = @transform_1, window_bounds = array<i64: 1, 8, 256>}, {pipeline_mode = #tpu.pipeline_mode<synchronous>, transform_indices = @transform_2, window_bounds = array<i64: 2, 8, 16>}, {pipeline_mode = #tpu.pipeline_mode<synchronous>, transform_indices = @transform_3, window_bounds = array<i64: 2, 8, 1>}, {pipeline_mode = #tpu.pipeline_mode<synchronous>, transform_indices = @transform_4, window_bounds = array<i64: 2, 16, 16>}, {pipeline_mode = #tpu.pipeline_mode<synchronous>, transform_indices = @transform_5, window_bounds = array<i64: 2, 16, 1>}, {pipeline_mode = #tpu.pipeline_mode<synchronous>, transform_indices = @transform_6, window_bounds = array<i64: 2, 8, 32>}, {pipeline_mode = #tpu.pipeline_mode<synchronous>, transform_indices = @transform_7, window_bounds = array<i64: 2, 8, 1>}, {pipeline_mode = #tpu.pipeline_mode<synchronous>, transform_indices = @transform_8, window_bounds = array<i64: 2, 16, 16>}, {pipeline_mode = #tpu.pipeline_mode<synchronous>, transform_indices = @transform_9, window_bounds = array<i64: 2, 16, 1>}, {transform_indices = @transform_10, window_bounds = array<i64: 1, 8, 256>}, {transform_indices = @transform_11, window_bounds = array<i64: 1, 8, 256>}, {transform_indices = @transform_12, window_bounds = array<i64: 1, 8, 256>}, {transform_indices = @transform_13, window_bounds = array<i64: 1, 8, 256>}]} {
    %c0 = arith.constant 0 : index
    %c0_0 = arith.constant 0 : index
    %c0_1 = arith.constant 0 : index
    %0 = vector.load %arg2[%c0, %c0_0, %c0_1] : memref<1x8x256xf32, #tpu.memory_space<vmem>>, vector<1x8x256xf32>
    %1 = vector.shape_cast %0 : vector<1x8x256xf32> to vector<8x256xf32>
    %c0_2 = arith.constant 0 : index
    %c0_3 = arith.constant 0 : index
    %c0_4 = arith.constant 0 : index
    %2 = vector.load %arg3[%c0_2, %c0_3, %c0_4] : memref<1x8x256xf32, #tpu.memory_space<vmem>>, vector<1x8x256xf32>
    %3 = vector.shape_cast %2 : vector<1x8x256xf32> to vector<8x256xf32>
    %4 = arith.negf %1 : vector<8x256xf32>
    %5 = math.exp %4 : vector<8x256xf32>
    %cst = arith.constant 1.000000e+00 : f32
    %6 = vector.broadcast %cst : f32 to vector<8x256xf32>
    %7 = arith.addf %6, %5 : vector<8x256xf32>
    %8 = arith.divf %6, %7 : vector<8x256xf32>
    %9 = arith.mulf %1, %8 : vector<8x256xf32>
    %10 = arith.subf %9, %1 : vector<8x256xf32>
    %11 = tpu.concatenate %9, %10 in 0 : vector<8x256xf32>, vector<8x256xf32> -> vector<16x256xf32>
    %c0_5 = arith.constant 0 : index
    %c0_6 = arith.constant 0 : index
    %c0_7 = arith.constant 0 : index
    %12 = vector.load %arg4[%c0_5, %c0_6, %c0_7] : memref<2x8x16xf32, #tpu.memory_space<vmem>>, vector<1x8x16xf32>
    %13 = vector.shape_cast %12 : vector<1x8x16xf32> to vector<8x16xf32>
    %cst_8 = arith.constant dense<0.000000e+00> : vector<8x256xf32>
    %14 = tpu.matmul %13, %11, %cst_8 {dimension_numbers = #tpu.dot_dimension_numbers<[1], [0], [0], [1], [0, 0, 1, 1], [], []>} : vector<8x16xf32>, vector<16x256xf32>, vector<8x256xf32> -> vector<8x256xf32>
    %c0_9 = arith.constant 0 : index
    %c0_10 = arith.constant 0 : index
    %c0_11 = arith.constant 0 : index
    %15 = vector.load %arg5[%c0_9, %c0_10, %c0_11] : memref<2x8x1xf32, #tpu.memory_space<vmem>>, vector<1x8x1xf32>
    %16 = vector.shape_cast %15 : vector<1x8x1xf32> to vector<8x1xf32>
    %17 = vector.broadcast %16 : vector<8x1xf32> to vector<8x256xf32>
    %18 = arith.addf %14, %17 : vector<8x256xf32>
    %19 = arith.negf %18 : vector<8x256xf32>
    %20 = math.exp %19 : vector<8x256xf32>
    %cst_12 = arith.constant 1.000000e+00 : f32
    %21 = vector.broadcast %cst_12 : f32 to vector<8x256xf32>
    %22 = arith.addf %21, %20 : vector<8x256xf32>
    %23 = arith.divf %21, %22 : vector<8x256xf32>
    %24 = arith.mulf %18, %23 : vector<8x256xf32>
    %25 = arith.subf %24, %18 : vector<8x256xf32>
    %26 = tpu.concatenate %24, %25 in 0 : vector<8x256xf32>, vector<8x256xf32> -> vector<16x256xf32>
    %c0_13 = arith.constant 0 : index
    %c0_14 = arith.constant 0 : index
    %c0_15 = arith.constant 0 : index
    %27 = vector.load %arg6[%c0_13, %c0_14, %c0_15] : memref<2x16x16xf32, #tpu.memory_space<vmem>>, vector<1x16x16xf32>
    %28 = vector.shape_cast %27 : vector<1x16x16xf32> to vector<16x16xf32>
    %cst_16 = arith.constant dense<0.000000e+00> : vector<16x256xf32>
    %29 = tpu.matmul %28, %26, %cst_16 {dimension_numbers = #tpu.dot_dimension_numbers<[1], [0], [0], [1], [0, 0, 1, 1], [], []>} : vector<16x16xf32>, vector<16x256xf32>, vector<16x256xf32> -> vector<16x256xf32>
    %c0_17 = arith.constant 0 : index
    %c0_18 = arith.constant 0 : index
    %c0_19 = arith.constant 0 : index
    %30 = vector.load %arg7[%c0_17, %c0_18, %c0_19] : memref<2x16x1xf32, #tpu.memory_space<vmem>>, vector<1x16x1xf32>
    %31 = vector.shape_cast %30 : vector<1x16x1xf32> to vector<16x1xf32>
    %32 = vector.broadcast %31 : vector<16x1xf32> to vector<16x256xf32>
    %33 = arith.addf %29, %32 : vector<16x256xf32>
    %34 = vector.extract_strided_slice %33 {offsets = [0, 0], sizes = [8, 256], strides = [1, 1]} : vector<16x256xf32> to vector<8x256xf32>
    %35 = vector.extract_strided_slice %33 {offsets = [8, 0], sizes = [8, 256], strides = [1, 1]} : vector<16x256xf32> to vector<8x256xf32>
    %36 = arith.negf %35 : vector<8x256xf32>
    %37 = math.exp %36 : vector<8x256xf32>
    %cst_20 = arith.constant 1.000000e+00 : f32
    %38 = vector.broadcast %cst_20 : f32 to vector<8x256xf32>
    %39 = arith.addf %38, %37 : vector<8x256xf32>
    %40 = arith.divf %38, %39 : vector<8x256xf32>
    %41 = arith.mulf %34, %40 : vector<8x256xf32>
    %42 = arith.addf %1, %41 : vector<8x256xf32>
    %c0_21 = arith.constant 0 : index
    %c0_22 = arith.constant 0 : index
    %c0_23 = arith.constant 0 : index
    %43 = vector.load %arg12[%c0_21, %c0_22, %c0_23] : memref<1x8x256xf32, #tpu.memory_space<vmem>>, vector<1x8x256xf32>
    %44 = vector.shape_cast %43 : vector<1x8x256xf32> to vector<8x256xf32>
    %45 = vector.shape_cast %42 : vector<8x256xf32> to vector<1x8x256xf32>
    tpu.vector_store %arg12[%c0_21, %c0_22, %c0_23], %45 {strides = array<i32>} : memref<1x8x256xf32, #tpu.memory_space<vmem>>, vector<1x8x256xf32>,
    %46 = arith.negf %42 : vector<8x256xf32>
    %47 = math.exp %46 : vector<8x256xf32>
    %cst_24 = arith.constant 1.000000e+00 : f32
    %48 = vector.broadcast %cst_24 : f32 to vector<8x256xf32>
    %49 = arith.addf %48, %47 : vector<8x256xf32>
    %50 = arith.divf %48, %49 : vector<8x256xf32>
    %51 = arith.mulf %42, %50 : vector<8x256xf32>
    %52 = arith.subf %51, %42 : vector<8x256xf32>
    %53 = tpu.concatenate %51, %52 in 0 : vector<8x256xf32>, vector<8x256xf32> -> vector<16x256xf32>
    %54 = arith.negf %3 : vector<8x256xf32>
    %55 = math.exp %54 : vector<8x256xf32>
    %cst_25 = arith.constant 1.000000e+00 : f32
    %56 = vector.broadcast %cst_25 : f32 to vector<8x256xf32>
    %57 = arith.addf %56, %55 : vector<8x256xf32>
    %58 = arith.divf %56, %57 : vector<8x256xf32>
    %59 = arith.mulf %3, %58 : vector<8x256xf32>
    %60 = arith.subf %59, %3 : vector<8x256xf32>
    %61 = tpu.concatenate %59, %60 in 0 : vector<8x256xf32>, vector<8x256xf32> -> vector<16x256xf32>
    %62 = tpu.concatenate %61, %53 in 0 : vector<16x256xf32>, vector<16x256xf32> -> vector<32x256xf32>
    %c0_26 = arith.constant 0 : index
    %c0_27 = arith.constant 0 : index
    %c0_28 = arith.constant 0 : index
    %63 = vector.load %arg8[%c0_26, %c0_27, %c0_28] : memref<2x8x32xf32, #tpu.memory_space<vmem>>, vector<1x8x32xf32>
    %64 = vector.shape_cast %63 : vector<1x8x32xf32> to vector<8x32xf32>
    %cst_29 = arith.constant dense<0.000000e+00> : vector<8x256xf32>
    %65 = tpu.matmul %64, %62, %cst_29 {dimension_numbers = #tpu.dot_dimension_numbers<[1], [0], [0], [1], [0, 0, 1, 1], [], []>} : vector<8x32xf32>, vector<32x256xf32>, vector<8x256xf32> -> vector<8x256xf32>
    %c0_30 = arith.constant 0 : index
    %c0_31 = arith.constant 0 : index
    %c0_32 = arith.constant 0 : index
    %66 = vector.load %arg9[%c0_30, %c0_31, %c0_32] : memref<2x8x1xf32, #tpu.memory_space<vmem>>, vector<1x8x1xf32>
    %67 = vector.shape_cast %66 : vector<1x8x1xf32> to vector<8x1xf32>
    %68 = vector.broadcast %67 : vector<8x1xf32> to vector<8x256xf32>
    %69 = arith.addf %65, %68 : vector<8x256xf32>
    %70 = arith.negf %69 : vector<8x256xf32>
    %71 = math.exp %70 : vector<8x256xf32>
    %cst_33 = arith.constant 1.000000e+00 : f32
    %72 = vector.broadcast %cst_33 : f32 to vector<8x256xf32>
    %73 = arith.addf %72, %71 : vector<8x256xf32>
    %74 = arith.divf %72, %73 : vector<8x256xf32>
    %75 = arith.mulf %69, %74 : vector<8x256xf32>
    %76 = arith.subf %75, %69 : vector<8x256xf32>
    %77 = tpu.concatenate %75, %76 in 0 : vector<8x256xf32>, vector<8x256xf32> -> vector<16x256xf32>
    %c0_34 = arith.constant 0 : index
    %c0_35 = arith.constant 0 : index
    %c0_36 = arith.constant 0 : index
    %78 = vector.load %arg10[%c0_34, %c0_35, %c0_36] : memref<2x16x16xf32, #tpu.memory_space<vmem>>, vector<1x16x16xf32>
    %79 = vector.shape_cast %78 : vector<1x16x16xf32> to vector<16x16xf32>
    %cst_37 = arith.constant dense<0.000000e+00> : vector<16x256xf32>
    %80 = tpu.matmul %79, %77, %cst_37 {dimension_numbers = #tpu.dot_dimension_numbers<[1], [0], [0], [1], [0, 0, 1, 1], [], []>} : vector<16x16xf32>, vector<16x256xf32>, vector<16x256xf32> -> vector<16x256xf32>
    %c0_38 = arith.constant 0 : index
    %c0_39 = arith.constant 0 : index
    %c0_40 = arith.constant 0 : index
    %81 = vector.load %arg11[%c0_38, %c0_39, %c0_40] : memref<2x16x1xf32, #tpu.memory_space<vmem>>, vector<1x16x1xf32>
    %82 = vector.shape_cast %81 : vector<1x16x1xf32> to vector<16x1xf32>
    %83 = vector.broadcast %82 : vector<16x1xf32> to vector<16x256xf32>
    %84 = arith.addf %80, %83 : vector<16x256xf32>
    %85 = vector.extract_strided_slice %84 {offsets = [0, 0], sizes = [8, 256], strides = [1, 1]} : vector<16x256xf32> to vector<8x256xf32>
    %86 = vector.extract_strided_slice %84 {offsets = [8, 0], sizes = [8, 256], strides = [1, 1]} : vector<16x256xf32> to vector<8x256xf32>
    %87 = arith.negf %86 : vector<8x256xf32>
    %88 = math.exp %87 : vector<8x256xf32>
    %cst_41 = arith.constant 1.000000e+00 : f32
    %89 = vector.broadcast %cst_41 : f32 to vector<8x256xf32>
    %90 = arith.addf %89, %88 : vector<8x256xf32>
    %91 = arith.divf %89, %90 : vector<8x256xf32>
    %92 = arith.mulf %85, %91 : vector<8x256xf32>
    %93 = arith.addf %3, %92 : vector<8x256xf32>
    %c0_42 = arith.constant 0 : index
    %c0_43 = arith.constant 0 : index
    %c0_44 = arith.constant 0 : index
    %94 = vector.load %arg14[%c0_42, %c0_43, %c0_44] : memref<1x8x256xf32, #tpu.memory_space<vmem>>, vector<1x8x256xf32>
    %95 = vector.shape_cast %94 : vector<1x8x256xf32> to vector<8x256xf32>
    %96 = vector.shape_cast %93 : vector<8x256xf32> to vector<1x8x256xf32>
    tpu.vector_store %arg14[%c0_42, %c0_43, %c0_44], %96 {strides = array<i32>} : memref<1x8x256xf32, #tpu.memory_space<vmem>>, vector<1x8x256xf32>,
    %c1 = arith.constant 1 : index
    %c0_45 = arith.constant 0 : index
    %c0_46 = arith.constant 0 : index
    %97 = vector.load %arg4[%c1, %c0_45, %c0_46] : memref<2x8x16xf32, #tpu.memory_space<vmem>>, vector<1x8x16xf32>
    %98 = vector.shape_cast %97 : vector<1x8x16xf32> to vector<8x16xf32>
    %cst_47 = arith.constant dense<0.000000e+00> : vector<8x256xf32>
    %99 = tpu.matmul %98, %53, %cst_47 {dimension_numbers = #tpu.dot_dimension_numbers<[1], [0], [0], [1], [0, 0, 1, 1], [], []>} : vector<8x16xf32>, vector<16x256xf32>, vector<8x256xf32> -> vector<8x256xf32>
    %c1_48 = arith.constant 1 : index
    %c0_49 = arith.constant 0 : index
    %c0_50 = arith.constant 0 : index
    %100 = vector.load %arg5[%c1_48, %c0_49, %c0_50] : memref<2x8x1xf32, #tpu.memory_space<vmem>>, vector<1x8x1xf32>
    %101 = vector.shape_cast %100 : vector<1x8x1xf32> to vector<8x1xf32>
    %102 = vector.broadcast %101 : vector<8x1xf32> to vector<8x256xf32>
    %103 = arith.addf %99, %102 : vector<8x256xf32>
    %104 = arith.negf %103 : vector<8x256xf32>
    %105 = math.exp %104 : vector<8x256xf32>
    %cst_51 = arith.constant 1.000000e+00 : f32
    %106 = vector.broadcast %cst_51 : f32 to vector<8x256xf32>
    %107 = arith.addf %106, %105 : vector<8x256xf32>
    %108 = arith.divf %106, %107 : vector<8x256xf32>
    %109 = arith.mulf %103, %108 : vector<8x256xf32>
    %110 = arith.subf %109, %103 : vector<8x256xf32>
    %111 = tpu.concatenate %109, %110 in 0 : vector<8x256xf32>, vector<8x256xf32> -> vector<16x256xf32>
    %c1_52 = arith.constant 1 : index
    %c0_53 = arith.constant 0 : index
    %c0_54 = arith.constant 0 : index
    %112 = vector.load %arg6[%c1_52, %c0_53, %c0_54] : memref<2x16x16xf32, #tpu.memory_space<vmem>>, vector<1x16x16xf32>
    %113 = vector.shape_cast %112 : vector<1x16x16xf32> to vector<16x16xf32>
    %cst_55 = arith.constant dense<0.000000e+00> : vector<16x256xf32>
    %114 = tpu.matmul %113, %111, %cst_55 {dimension_numbers = #tpu.dot_dimension_numbers<[1], [0], [0], [1], [0, 0, 1, 1], [], []>} : vector<16x16xf32>, vector<16x256xf32>, vector<16x256xf32> -> vector<16x256xf32>
    %c1_56 = arith.constant 1 : index
    %c0_57 = arith.constant 0 : index
    %c0_58 = arith.constant 0 : index
    %115 = vector.load %arg7[%c1_56, %c0_57, %c0_58] : memref<2x16x1xf32, #tpu.memory_space<vmem>>, vector<1x16x1xf32>
    %116 = vector.shape_cast %115 : vector<1x16x1xf32> to vector<16x1xf32>
    %117 = vector.broadcast %116 : vector<16x1xf32> to vector<16x256xf32>
    %118 = arith.addf %114, %117 : vector<16x256xf32>
    %119 = vector.extract_strided_slice %118 {offsets = [0, 0], sizes = [8, 256], strides = [1, 1]} : vector<16x256xf32> to vector<8x256xf32>
    %120 = vector.extract_strided_slice %118 {offsets = [8, 0], sizes = [8, 256], strides = [1, 1]} : vector<16x256xf32> to vector<8x256xf32>
    %121 = arith.negf %120 : vector<8x256xf32>
    %122 = math.exp %121 : vector<8x256xf32>
    %cst_59 = arith.constant 1.000000e+00 : f32
    %123 = vector.broadcast %cst_59 : f32 to vector<8x256xf32>
    %124 = arith.addf %123, %122 : vector<8x256xf32>
    %125 = arith.divf %123, %124 : vector<8x256xf32>
    %126 = arith.mulf %119, %125 : vector<8x256xf32>
    %127 = arith.addf %42, %126 : vector<8x256xf32>
    %c0_60 = arith.constant 0 : index
    %c0_61 = arith.constant 0 : index
    %c0_62 = arith.constant 0 : index
    %128 = vector.load %arg13[%c0_60, %c0_61, %c0_62] : memref<1x8x256xf32, #tpu.memory_space<vmem>>, vector<1x8x256xf32>
    %129 = vector.shape_cast %128 : vector<1x8x256xf32> to vector<8x256xf32>
    %130 = vector.shape_cast %127 : vector<8x256xf32> to vector<1x8x256xf32>
    tpu.vector_store %arg13[%c0_60, %c0_61, %c0_62], %130 {strides = array<i32>} : memref<1x8x256xf32, #tpu.memory_space<vmem>>, vector<1x8x256xf32>,
    %131 = arith.negf %127 : vector<8x256xf32>
    %132 = math.exp %131 : vector<8x256xf32>
    %cst_63 = arith.constant 1.000000e+00 : f32
    %133 = vector.broadcast %cst_63 : f32 to vector<8x256xf32>
    %134 = arith.addf %133, %132 : vector<8x256xf32>
    %135 = arith.divf %133, %134 : vector<8x256xf32>
    %136 = arith.mulf %127, %135 : vector<8x256xf32>
    %137 = arith.subf %136, %127 : vector<8x256xf32>
    %138 = tpu.concatenate %136, %137 in 0 : vector<8x256xf32>, vector<8x256xf32> -> vector<16x256xf32>
    %139 = arith.negf %93 : vector<8x256xf32>
    %140 = math.exp %139 : vector<8x256xf32>
    %cst_64 = arith.constant 1.000000e+00 : f32
    %141 = vector.broadcast %cst_64 : f32 to vector<8x256xf32>
    %142 = arith.addf %141, %140 : vector<8x256xf32>
    %143 = arith.divf %141, %142 : vector<8x256xf32>
    %144 = arith.mulf %93, %143 : vector<8x256xf32>
    %145 = arith.subf %144, %93 : vector<8x256xf32>
    %146 = tpu.concatenate %144, %145 in 0 : vector<8x256xf32>, vector<8x256xf32> -> vector<16x256xf32>
    %147 = tpu.concatenate %146, %138 in 0 : vector<16x256xf32>, vector<16x256xf32> -> vector<32x256xf32>
    %c1_65 = arith.constant 1 : index
    %c0_66 = arith.constant 0 : index
    %c0_67 = arith.constant 0 : index
    %148 = vector.load %arg8[%c1_65, %c0_66, %c0_67] : memref<2x8x32xf32, #tpu.memory_space<vmem>>, vector<1x8x32xf32>
    %149 = vector.shape_cast %148 : vector<1x8x32xf32> to vector<8x32xf32>
    %cst_68 = arith.constant dense<0.000000e+00> : vector<8x256xf32>
    %150 = tpu.matmul %149, %147, %cst_68 {dimension_numbers = #tpu.dot_dimension_numbers<[1], [0], [0], [1], [0, 0, 1, 1], [], []>} : vector<8x32xf32>, vector<32x256xf32>, vector<8x256xf32> -> vector<8x256xf32>
    %c1_69 = arith.constant 1 : index
    %c0_70 = arith.constant 0 : index
    %c0_71 = arith.constant 0 : index
    %151 = vector.load %arg9[%c1_69, %c0_70, %c0_71] : memref<2x8x1xf32, #tpu.memory_space<vmem>>, vector<1x8x1xf32>
    %152 = vector.shape_cast %151 : vector<1x8x1xf32> to vector<8x1xf32>
    %153 = vector.broadcast %152 : vector<8x1xf32> to vector<8x256xf32>
    %154 = arith.addf %150, %153 : vector<8x256xf32>
    %155 = arith.negf %154 : vector<8x256xf32>
    %156 = math.exp %155 : vector<8x256xf32>
    %cst_72 = arith.constant 1.000000e+00 : f32
    %157 = vector.broadcast %cst_72 : f32 to vector<8x256xf32>
    %158 = arith.addf %157, %156 : vector<8x256xf32>
    %159 = arith.divf %157, %158 : vector<8x256xf32>
    %160 = arith.mulf %154, %159 : vector<8x256xf32>
    %161 = arith.subf %160, %154 : vector<8x256xf32>
    %162 = tpu.concatenate %160, %161 in 0 : vector<8x256xf32>, vector<8x256xf32> -> vector<16x256xf32>
    %c1_73 = arith.constant 1 : index
    %c0_74 = arith.constant 0 : index
    %c0_75 = arith.constant 0 : index
    %163 = vector.load %arg10[%c1_73, %c0_74, %c0_75] : memref<2x16x16xf32, #tpu.memory_space<vmem>>, vector<1x16x16xf32>
    %164 = vector.shape_cast %163 : vector<1x16x16xf32> to vector<16x16xf32>
    %cst_76 = arith.constant dense<0.000000e+00> : vector<16x256xf32>
    %165 = tpu.matmul %164, %162, %cst_76 {dimension_numbers = #tpu.dot_dimension_numbers<[1], [0], [0], [1], [0, 0, 1, 1], [], []>} : vector<16x16xf32>, vector<16x256xf32>, vector<16x256xf32> -> vector<16x256xf32>
    %c1_77 = arith.constant 1 : index
    %c0_78 = arith.constant 0 : index
    %c0_79 = arith.constant 0 : index
    %166 = vector.load %arg11[%c1_77, %c0_78, %c0_79] : memref<2x16x1xf32, #tpu.memory_space<vmem>>, vector<1x16x1xf32>
    %167 = vector.shape_cast %166 : vector<1x16x1xf32> to vector<16x1xf32>
    %168 = vector.broadcast %167 : vector<16x1xf32> to vector<16x256xf32>
    %169 = arith.addf %165, %168 : vector<16x256xf32>
    %170 = vector.extract_strided_slice %169 {offsets = [0, 0], sizes = [8, 256], strides = [1, 1]} : vector<16x256xf32> to vector<8x256xf32>
    %171 = vector.extract_strided_slice %169 {offsets = [8, 0], sizes = [8, 256], strides = [1, 1]} : vector<16x256xf32> to vector<8x256xf32>
    %172 = arith.negf %171 : vector<8x256xf32>
    %173 = math.exp %172 : vector<8x256xf32>
    %cst_80 = arith.constant 1.000000e+00 : f32
    %174 = vector.broadcast %cst_80 : f32 to vector<8x256xf32>
    %175 = arith.addf %174, %173 : vector<8x256xf32>
    %176 = arith.divf %174, %175 : vector<8x256xf32>
    %177 = arith.mulf %170, %176 : vector<8x256xf32>
    %178 = arith.addf %93, %177 : vector<8x256xf32>
    %c0_81 = arith.constant 0 : index
    %c0_82 = arith.constant 0 : index
    %c0_83 = arith.constant 0 : index
    %179 = vector.load %arg15[%c0_81, %c0_82, %c0_83] : memref<1x8x256xf32, #tpu.memory_space<vmem>>, vector<1x8x256xf32>
    %180 = vector.shape_cast %179 : vector<1x8x256xf32> to vector<8x256xf32>
    %181 = vector.shape_cast %178 : vector<8x256xf32> to vector<1x8x256xf32>
    tpu.vector_store %arg15[%c0_81, %c0_82, %c0_83], %181 {strides = array<i32>} : memref<1x8x256xf32, #tpu.memory_space<vmem>>, vector<1x8x256xf32>,
    return
  }
  func.func @transform_0(%arg0: i32, %arg1: i32) -> (i32, i32, i32) {
    %c0_i32 = arith.constant 0 : i32
    %c0_i32_0 = arith.constant 0 : i32
    return %arg0, %c0_i32, %arg1 : i32, i32, i32
  }
  func.func @transform_1(%arg0: i32, %arg1: i32) -> (i32, i32, i32) {
    %c0_i32 = arith.constant 0 : i32
    %c0_i32_0 = arith.constant 0 : i32
    return %arg0, %c0_i32, %arg1 : i32, i32, i32
  }
  func.func @transform_2(%arg0: i32, %arg1: i32) -> (i32, i32, i32) {
    %c0_i32 = arith.constant 0 : i32
    %c0_i32_0 = arith.constant 0 : i32
    %c0_i32_1 = arith.constant 0 : i32
    %c0_i32_2 = arith.constant 0 : i32
    return %c0_i32, %c0_i32_0, %c0_i32_1 : i32, i32, i32
  }
  func.func @transform_3(%arg0: i32, %arg1: i32) -> (i32, i32, i32) {
    %c0_i32 = arith.constant 0 : i32
    %c0_i32_0 = arith.constant 0 : i32
    %c0_i32_1 = arith.constant 0 : i32
    %c0_i32_2 = arith.constant 0 : i32
    return %c0_i32, %c0_i32_0, %c0_i32_1 : i32, i32, i32
  }
  func.func @transform_4(%arg0: i32, %arg1: i32) -> (i32, i32, i32) {
    %c0_i32 = arith.constant 0 : i32
    %c0_i32_0 = arith.constant 0 : i32
    %c0_i32_1 = arith.constant 0 : i32
    %c0_i32_2 = arith.constant 0 : i32
    return %c0_i32, %c0_i32_0, %c0_i32_1 : i32, i32, i32
  }
  func.func @transform_5(%arg0: i32, %arg1: i32) -> (i32, i32, i32) {
    %c0_i32 = arith.constant 0 : i32
    %c0_i32_0 = arith.constant 0 : i32
    %c0_i32_1 = arith.constant 0 : i32
    %c0_i32_2 = arith.constant 0 : i32
    return %c0_i32, %c0_i32_0, %c0_i32_1 : i32, i32, i32
  }
  func.func @transform_6(%arg0: i32, %arg1: i32) -> (i32, i32, i32) {
    %c0_i32 = arith.constant 0 : i32
    %c0_i32_0 = arith.constant 0 : i32
    %c0_i32_1 = arith.constant 0 : i32
    %c0_i32_2 = arith.constant 0 : i32
    return %c0_i32, %c0_i32_0, %c0_i32_1 : i32, i32, i32
  }
  func.func @transform_7(%arg0: i32, %arg1: i32) -> (i32, i32, i32) {
    %c0_i32 = arith.constant 0 : i32
    %c0_i32_0 = arith.constant 0 : i32
    %c0_i32_1 = arith.constant 0 : i32
    %c0_i32_2 = arith.constant 0 : i32
    return %c0_i32, %c0_i32_0, %c0_i32_1 : i32, i32, i32
  }
  func.func @transform_8(%arg0: i32, %arg1: i32) -> (i32, i32, i32) {
    %c0_i32 = arith.constant 0 : i32
    %c0_i32_0 = arith.constant 0 : i32
    %c0_i32_1 = arith.constant 0 : i32
    %c0_i32_2 = arith.constant 0 : i32
    return %c0_i32, %c0_i32_0, %c0_i32_1 : i32, i32, i32
  }
  func.func @transform_9(%arg0: i32, %arg1: i32) -> (i32, i32, i32) {
    %c0_i32 = arith.constant 0 : i32
    %c0_i32_0 = arith.constant 0 : i32
    %c0_i32_1 = arith.constant 0 : i32
    %c0_i32_2 = arith.constant 0 : i32
    return %c0_i32, %c0_i32_0, %c0_i32_1 : i32, i32, i32
  }
  func.func @transform_10(%arg0: i32, %arg1: i32) -> (i32, i32, i32) {
    %c0_i32 = arith.constant 0 : i32
    %c0_i32_0 = arith.constant 0 : i32
    return %arg0, %c0_i32, %arg1 : i32, i32, i32
  }
  func.func @transform_11(%arg0: i32, %arg1: i32) -> (i32, i32, i32) {
    %c0_i32 = arith.constant 0 : i32
    %c0_i32_0 = arith.constant 0 : i32
    return %arg0, %c0_i32, %arg1 : i32, i32, i32
  }
  func.func @transform_12(%arg0: i32, %arg1: i32) -> (i32, i32, i32) {
    %c0_i32 = arith.constant 0 : i32
    %c0_i32_0 = arith.constant 0 : i32
    return %arg0, %c0_i32, %arg1 : i32, i32, i32
  }
  func.func @transform_13(%arg0: i32, %arg1: i32) -> (i32, i32, i32) {
    %c0_i32 = arith.constant 0 : i32
    %c0_i32_0 = arith.constant 0 : i32
    return %arg0, %c0_i32, %arg1 : i32, i32, i32
  }
}

</mosaic_0001>

<llo_original>
// kernel: tpu_custom_call.1
$region0: #{tpu_custom_call.1}
  #allocation0 [shape = 'u32[]', space=smem, size = 0x4, offset = 0x4, fixed_abs, tag = 'smem constant byte address 0x4 - core index']
  #allocation1 [shape = 'u32[144,128]{1,0:T(1,128)}', space=vmem, size = 0x12000, scoped, tag = 'internal scratch']
  %s0 = inlined_call_operand.vmem [shape: f32[2,8,256], index: 0, kind: input, shape index: {}]
  %s1 = inlined_call_operand.vmem [shape: f32[2,8,256], index: 1, kind: input, shape index: {}]
  %s2 = inlined_call_operand.hbm [shape: f32[2,8,16], index: 2, kind: input, shape index: {}]
  %s3 = inlined_call_operand.vmem [shape: f32[2,8,1], index: 3, kind: input, shape index: {}]
  %s4 = inlined_call_operand.vmem [shape: f32[2,16,16], index: 4, kind: input, shape index: {}]
  %s5 = inlined_call_operand.vmem [shape: f32[2,16,1], index: 5, kind: input, shape index: {}]
  %s6 = inlined_call_operand.hbm [shape: f32[2,8,32], index: 6, kind: input, shape index: {}]
  %s7 = inlined_call_operand.vmem [shape: f32[2,8,1], index: 7, kind: input, shape index: {}]
  %s8 = inlined_call_operand.vmem [shape: f32[2,16,16], index: 8, kind: input, shape index: {}]
  %s9 = inlined_call_operand.vmem [shape: f32[2,16,1], index: 9, kind: input, shape index: {}]
  %s10 = inlined_call_operand.hbm [shape: f32[2,8,256], index: 10, kind: output, shape index: {0}]
  %s11 = inlined_call_operand.hbm [shape: f32[2,8,256], index: 11, kind: output, shape index: {1}]
  %s12 = inlined_call_operand.hbm [shape: f32[2,8,256], index: 12, kind: output, shape index: {2}]
  %s13 = inlined_call_operand.hbm [shape: f32[2,8,256], index: 13, kind: output, shape index: {3}]
  %14 = xla_tuple %s10, %s11, %s12, %s13
  %s15 = sld [smem:[#allocation0]]
  $region105: #{tpu_custom_call.1} parent=0
    _
  %s17 = ssub.s32 1, %s15
  %s18 = scalar_select 0, %s17, %s15
  $region1: #{tpu_custom_call.1} parent=0
    #allocation2 [shape = 'u8[8192]{0}', space=vmem, size = 0x2000, scoped, tag = 'input window, operand 2, single buffered']
    #allocation3 [shape = 's32[2]{0}', space=sflag, size = 0x8, scoped, tag = 'scoped memory for tpu_custom_call.1']
    #allocation4 [shape = 's32[2]{0}', space=sflag, size = 0x8, scoped, tag = 'scoped memory for tpu_custom_call.1']
    #allocation5 [shape = 'u8[8192]{0}', space=vmem, size = 0x2000, scoped, tag = 'input window, operand 6, single buffered']
    #allocation6 [shape = 's32[1]{0}', space=sflag, size = 0x4, scoped, tag = 'scoped memory for tpu_custom_call.1']
    #allocation7 [shape = 'u8[16384]{0}', space=vmem, size = 0x4000, scoped, tag = 'output window, operand 0']
    #allocation8 [shape = 'u8[16384]{0}', space=vmem, size = 0x4000, scoped, tag = 'output window, operand 1']
    #allocation9 [shape = 's32[2]{0}', space=sflag, size = 0x8, scoped, tag = 'scoped memory for tpu_custom_call.1']
    #allocation10 [shape = 'u8[16384]{0}', space=vmem, size = 0x4000, scoped, tag = 'output window, operand 2']
    #allocation11 [shape = 'u8[16384]{0}', space=vmem, size = 0x4000, scoped, tag = 'output window, operand 3']
    #allocation12 [shape = 's32[2]{0}', space=sflag, size = 0x8, scoped, tag = 'scoped memory for tpu_custom_call.1']
    %19 = vsyncpa [#allocation3], 0
    %20 = vsyncpa [#allocation6], 0
    %21 = vsyncpa [#allocation4], 0
    %s22 = scalar_lea.sflag [#allocation4], 1
    %23 = vsyncpa %s22, 0
    %24 = vsyncpa [#allocation9], 0
    %s25 = scalar_lea.sflag [#allocation9], 1
    %26 = vsyncpa %s25, 0
    %27 = vsyncpa [#allocation12], 0
    %s28 = scalar_lea.sflag [#allocation12], 1
    %29 = vsyncpa %s28, 0
    loop: start=0, step=1, limit=4
    $region2: #{tpu_custom_call.1} parent=1 // loop_pre_header
      _
    $region3: #{tpu_custom_call.1} parent=1 // loop_header
      %s31 = sphi 0, %s35
      %p32 = scmp.ge.s32.totalorder %s31, 4
      %s38 = sphi 0, %s50
      %s39 = sphi 0, %s46
      %s40 = sphi 0, %s38
      %s41 = sphi 0, %s39
      %s42 = sphi 0, %s40
      %s43 = sphi 0, %s41
      %s55 = sphi 0, %s57
      %s58 = sphi 0, %s55
      %s59 = sphi 0, %s58
      %s75 = sphi 0, %s59
      %s83 = sphi 0, %s85
      %s86 = sphi 0, %s83
      %s87 = sphi 0, %s86
      %s103 = sphi 0, %s87
      %s107 = sphi 0, %s107
      %s109 = sphi 0, %s107
      %s110 = sphi 0, %s109
      %s124 = sphi 0, %s110
      %s128 = sphi 0, %s128
      %s130 = sphi 0, %s128
      %s131 = sphi 0, %s130
      %s145 = sphi 0, %s131
      %s149 = sphi 0, %s149
      %s151 = sphi 0, %s149
      %s152 = sphi 0, %s151
      %s166 = sphi 0, %s152
      %s170 = sphi 0, %s170
      %s172 = sphi 0, %s170
      %s173 = sphi 0, %s172
      %s187 = sphi 0, %s173
      %s191 = sphi 0, %s191
      %s193 = sphi 0, %s191
      %s194 = sphi 0, %s193
      %s208 = sphi 0, %s194
      %s212 = sphi 0, %s212
      %s214 = sphi 0, %s212
      %s215 = sphi 0, %s214
      %s229 = sphi 0, %s215
      %s233 = sphi 0, %s233
      %s235 = sphi 0, %s233
      %s236 = sphi 0, %s235
      %s250 = sphi 0, %s236
      %s254 = sphi 0, %s254
      %s256 = sphi 0, %s254
      %s257 = sphi 0, %s256
      %s271 = sphi 0, %s257
      %s279 = sphi 0, %s281
      %s282 = sphi 0, %s279
      %s283 = sphi 0, %s282
      %s299 = sphi 0, %s283
      %s307 = sphi 0, %s309
      %s310 = sphi 0, %s307
      %s311 = sphi 0, %s310
      %s327 = sphi 0, %s311
      %s335 = sphi 0, %s337
      %s338 = sphi 0, %s335
      %s339 = sphi 0, %s338
      %s355 = sphi 0, %s339
      %s363 = sphi 0, %s365
      %s366 = sphi 0, %s363
      %s367 = sphi 0, %s366
      %s383 = sphi 0, %s367
    $region4: #{tpu_custom_call.1} parent=1 // loop_header_branch
      %34 = sbr.rel (%p32) target = $region8
    $region5: #{tpu_custom_call.1} parent=1 // loop_body
      %s36 = ssub.s32 %s31, 1
      %s37 = ssub.s32 %s31, 2
      %s44 = sadd.s32 1, %s39
      %p45 = scmp.ge.s32.totalorder %s44, 1
      %s46 = scalar_select %p45, 0, %s44
      %s47 = sadd.s32 1, %s38
      %s48 = scalar_select %p45, %s47, %s38
      %p49 = scmp.ge.s32.totalorder %s48, 2
      %s50 = scalar_select %p49, 0, %s48
      %s51 = ssub.s32 %s38, %s50
      %s52 = ssub.s32 %s39, %s46
      %s53 = sor.u32 %s51, %s52
      %p54 = scmp.eq.s32.totalorder %s53, 0
      %s56 = sadd.s32 %s55, 1
      %s57 = scalar_select %p54, %s55, %s56
      %p60 = pneg %p54
      %p61 = scmp.eq.s32.totalorder %s31, 1
      %p62 = por %p60, %p61
      %p63 = scmp.ne.s32.totalorder %s55, %s58
      %p64 = scmp.eq.s32.totalorder %s31, 0
      %p65 = por %p63, %p64
      %p66 = scmp.ne.s32.totalorder %s55, %s58
      %p67 = scmp.eq.s32.totalorder %s36, 1
      %p68 = por %p66, %p67
      %p69 = scmp.ne.s32.totalorder %s58, %s59
      %p70 = scmp.eq.s32.totalorder %s36, 0
      %p71 = por %p69, %p70
      %p72 = scmp.ne.s32.totalorder %s58, %s59
      %p73 = scmp.eq.s32.totalorder %s37, 1
      %p74 = por %p72, %p73
      %p76 = scmp.ne.s32.totalorder %s59, %s75
      %p77 = scmp.eq.s32.totalorder %s37, 0
      %p78 = por %p76, %p77
      %s79 = ssub.s32 %s38, %s50
      %s80 = ssub.s32 %s39, %s46
      %s81 = sor.u32 %s79, %s80
      %p82 = scmp.eq.s32.totalorder %s81, 0
      %s84 = sadd.s32 %s83, 1
      %s85 = scalar_select %p82, %s83, %s84
      %p88 = pneg %p82
      %p89 = scmp.eq.s32.totalorder %s31, 1
      %p90 = por %p88, %p89
      %p91 = scmp.ne.s32.totalorder %s83, %s86
      %p92 = scmp.eq.s32.totalorder %s31, 0
      %p93 = por %p91, %p92
      %p94 = scmp.ne.s32.totalorder %s83, %s86
      %p95 = scmp.eq.s32.totalorder %s36, 1
      %p96 = por %p94, %p95
      %p97 = scmp.ne.s32.totalorder %s86, %s87
      %p98 = scmp.eq.s32.totalorder %s36, 0
      %p99 = por %p97, %p98
      %p100 = scmp.ne.s32.totalorder %s86, %s87
      %p101 = scmp.eq.s32.totalorder %s37, 1
      %p102 = por %p100, %p101
      %p104 = scmp.ne.s32.totalorder %s87, %s103
      %p105 = scmp.eq.s32.totalorder %s37, 0
      %p106 = por %p104, %p105
      %s108 = sadd.s32 %s107, 1
      %p111 = scmp.eq.s32.totalorder %s31, 1
      %p112 = scmp.ne.s32.totalorder %s107, %s109
      %p113 = scmp.eq.s32.totalorder %s31, 0
      %p114 = por %p112, %p113
      %p115 = scmp.ne.s32.totalorder %s107, %s109
      %p116 = scmp.eq.s32.totalorder %s36, 1
      %p117 = por %p115, %p116
      %p118 = scmp.ne.s32.totalorder %s109, %s110
      %p119 = scmp.eq.s32.totalorder %s36, 0
      %p120 = por %p118, %p119
      %p121 = scmp.ne.s32.totalorder %s109, %s110
      %p122 = scmp.eq.s32.totalorder %s37, 1
      %p123 = por %p121, %p122
      %p125 = scmp.ne.s32.totalorder %s110, %s124
      %p126 = scmp.eq.s32.totalorder %s37, 0
      %p127 = por %p125, %p126
      %s129 = sadd.s32 %s128, 1
      %p132 = scmp.eq.s32.totalorder %s31, 1
      %p133 = scmp.ne.s32.totalorder %s128, %s130
      %p134 = scmp.eq.s32.totalorder %s31, 0
      %p135 = por %p133, %p134
      %p136 = scmp.ne.s32.totalorder %s128, %s130
      %p137 = scmp.eq.s32.totalorder %s36, 1
      %p138 = por %p136, %p137
      %p139 = scmp.ne.s32.totalorder %s130, %s131
      %p140 = scmp.eq.s32.totalorder %s36, 0
      %p141 = por %p139, %p140
      %p142 = scmp.ne.s32.totalorder %s130, %s131
      %p143 = scmp.eq.s32.totalorder %s37, 1
      %p144 = por %p142, %p143
      %p146 = scmp.ne.s32.totalorder %s131, %s145
      %p147 = scmp.eq.s32.totalorder %s37, 0
      %p148 = por %p146, %p147
      %s150 = sadd.s32 %s149, 1
      %p153 = scmp.eq.s32.totalorder %s31, 1
      %p154 = scmp.ne.s32.totalorder %s149, %s151
      %p155 = scmp.eq.s32.totalorder %s31, 0
      %p156 = por %p154, %p155
      %p157 = scmp.ne.s32.totalorder %s149, %s151
      %p158 = scmp.eq.s32.totalorder %s36, 1
      %p159 = por %p157, %p158
      %p160 = scmp.ne.s32.totalorder %s151, %s152
      %p161 = scmp.eq.s32.totalorder %s36, 0
      %p162 = por %p160, %p161
      %p163 = scmp.ne.s32.totalorder %s151, %s152
      %p164 = scmp.eq.s32.totalorder %s37, 1
      %p165 = por %p163, %p164
      %p167 = scmp.ne.s32.totalorder %s152, %s166
      %p168 = scmp.eq.s32.totalorder %s37, 0
      %p169 = por %p167, %p168
      %s171 = sadd.s32 %s170, 1
      %p174 = scmp.eq.s32.totalorder %s31, 1
      %p175 = scmp.ne.s32.totalorder %s170, %s172
      %p176 = scmp.eq.s32.totalorder %s31, 0
      %p177 = por %p175, %p176
      %p178 = scmp.ne.s32.totalorder %s170, %s172
      %p179 = scmp.eq.s32.totalorder %s36, 1
      %p180 = por %p178, %p179
      %p181 = scmp.ne.s32.totalorder %s172, %s173
      %p182 = scmp.eq.s32.totalorder %s36, 0
      %p183 = por %p181, %p182
      %p184 = scmp.ne.s32.totalorder %s172, %s173
      %p185 = scmp.eq.s32.totalorder %s37, 1
      %p186 = por %p184, %p185
      %p188 = scmp.ne.s32.totalorder %s173, %s187
      %p189 = scmp.eq.s32.totalorder %s37, 0
      %p190 = por %p188, %p189
      %s192 = sadd.s32 %s191, 1
      %p195 = scmp.eq.s32.totalorder %s31, 1
      %p196 = scmp.ne.s32.totalorder %s191, %s193
      %p197 = scmp.eq.s32.totalorder %s31, 0
      %p198 = por %p196, %p197
      %p199 = scmp.ne.s32.totalorder %s191, %s193
      %p200 = scmp.eq.s32.totalorder %s36, 1
      %p201 = por %p199, %p200
      %p202 = scmp.ne.s32.totalorder %s193, %s194
      %p203 = scmp.eq.s32.totalorder %s36, 0
      %p204 = por %p202, %p203
      %p205 = scmp.ne.s32.totalorder %s193, %s194
      %p206 = scmp.eq.s32.totalorder %s37, 1
      %p207 = por %p205, %p206
      %p209 = scmp.ne.s32.totalorder %s194, %s208
      %p210 = scmp.eq.s32.totalorder %s37, 0
      %p211 = por %p209, %p210
      %s213 = sadd.s32 %s212, 1
      %p216 = scmp.eq.s32.totalorder %s31, 1
      %p217 = scmp.ne.s32.totalorder %s212, %s214
      %p218 = scmp.eq.s32.totalorder %s31, 0
      %p219 = por %p217, %p218
      %p220 = scmp.ne.s32.totalorder %s212, %s214
      %p221 = scmp.eq.s32.totalorder %s36, 1
      %p222 = por %p220, %p221
      %p223 = scmp.ne.s32.totalorder %s214, %s215
      %p224 = scmp.eq.s32.totalorder %s36, 0
      %p225 = por %p223, %p224
      %p226 = scmp.ne.s32.totalorder %s214, %s215
      %p227 = scmp.eq.s32.totalorder %s37, 1
      %p228 = por %p226, %p227
      %p230 = scmp.ne.s32.totalorder %s215, %s229
      %p231 = scmp.eq.s32.totalorder %s37, 0
      %p232 = por %p230, %p231
      %s234 = sadd.s32 %s233, 1
      %p237 = scmp.eq.s32.totalorder %s31, 1
      %p238 = scmp.ne.s32.totalorder %s233, %s235
      %p239 = scmp.eq.s32.totalorder %s31, 0
      %p240 = por %p238, %p239
      %p241 = scmp.ne.s32.totalorder %s233, %s235
      %p242 = scmp.eq.s32.totalorder %s36, 1
      %p243 = por %p241, %p242
      %p244 = scmp.ne.s32.totalorder %s235, %s236
      %p245 = scmp.eq.s32.totalorder %s36, 0
      %p246 = por %p244, %p245
      %p247 = scmp.ne.s32.totalorder %s235, %s236
      %p248 = scmp.eq.s32.totalorder %s37, 1
      %p249 = por %p247, %p248
      %p251 = scmp.ne.s32.totalorder %s236, %s250
      %p252 = scmp.eq.s32.totalorder %s37, 0
      %p253 = por %p251, %p252
      %s255 = sadd.s32 %s254, 1
      %p258 = scmp.eq.s32.totalorder %s31, 1
      %p259 = scmp.ne.s32.totalorder %s254, %s256
      %p260 = scmp.eq.s32.totalorder %s31, 0
      %p261 = por %p259, %p260
      %p262 = scmp.ne.s32.totalorder %s254, %s256
      %p263 = scmp.eq.s32.totalorder %s36, 1
      %p264 = por %p262, %p263
      %p265 = scmp.ne.s32.totalorder %s256, %s257
      %p266 = scmp.eq.s32.totalorder %s36, 0
      %p267 = por %p265, %p266
      %p268 = scmp.ne.s32.totalorder %s256, %s257
      %p269 = scmp.eq.s32.totalorder %s37, 1
      %p270 = por %p268, %p269
      %p272 = scmp.ne.s32.totalorder %s257, %s271
      %p273 = scmp.eq.s32.totalorder %s37, 0
      %p274 = por %p272, %p273
      %s275 = ssub.s32 %s38, %s50
      %s276 = ssub.s32 %s39, %s46
      %s277 = sor.u32 %s275, %s276
      %p278 = scmp.eq.s32.totalorder %s277, 0
      %s280 = sadd.s32 %s279, 1
      %s281 = scalar_select %p278, %s279, %s280
      %p284 = pneg %p278
      %p285 = scmp.eq.s32.totalorder %s31, 1
      %p286 = por %p284, %p285
      %p287 = scmp.ne.s32.totalorder %s279, %s282
      %p288 = scmp.eq.s32.totalorder %s31, 0
      %p289 = por %p287, %p288
      %p290 = scmp.ne.s32.totalorder %s279, %s282
      %p291 = scmp.eq.s32.totalorder %s36, 1
      %p292 = por %p290, %p291
      %p293 = scmp.ne.s32.totalorder %s282, %s283
      %p294 = scmp.eq.s32.totalorder %s36, 0
      %p295 = por %p293, %p294
      %p296 = scmp.ne.s32.totalorder %s282, %s283
      %p297 = scmp.eq.s32.totalorder %s37, 1
      %p298 = por %p296, %p297
      %p300 = scmp.ne.s32.totalorder %s283, %s299
      %p301 = scmp.eq.s32.totalorder %s37, 0
      %p302 = por %p300, %p301
      %s303 = ssub.s32 %s38, %s50
      %s304 = ssub.s32 %s39, %s46
      %s305 = sor.u32 %s303, %s304
      %p306 = scmp.eq.s32.totalorder %s305, 0
      %s308 = sadd.s32 %s307, 1
      %s309 = scalar_select %p306, %s307, %s308
      %p312 = pneg %p306
      %p313 = scmp.eq.s32.totalorder %s31, 1
      %p314 = por %p312, %p313
      %p315 = scmp.ne.s32.totalorder %s307, %s310
      %p316 = scmp.eq.s32.totalorder %s31, 0
      %p317 = por %p315, %p316
      %p318 = scmp.ne.s32.totalorder %s307, %s310
      %p319 = scmp.eq.s32.totalorder %s36, 1
      %p320 = por %p318, %p319
      %p321 = scmp.ne.s32.totalorder %s310, %s311
      %p322 = scmp.eq.s32.totalorder %s36, 0
      %p323 = por %p321, %p322
      %p324 = scmp.ne.s32.totalorder %s310, %s311
      %p325 = scmp.eq.s32.totalorder %s37, 1
      %p326 = por %p324, %p325
      %p328 = scmp.ne.s32.totalorder %s311, %s327
      %p329 = scmp.eq.s32.totalorder %s37, 0
      %p330 = por %p328, %p329
      %s331 = ssub.s32 %s38, %s50
      %s332 = ssub.s32 %s39, %s46
      %s333 = sor.u32 %s331, %s332
      %p334 = scmp.eq.s32.totalorder %s333, 0
      %s336 = sadd.s32 %s335, 1
      %s337 = scalar_select %p334, %s335, %s336
      %p340 = pneg %p334
      %p341 = scmp.eq.s32.totalorder %s31, 1
      %p342 = por %p340, %p341
      %p343 = scmp.ne.s32.totalorder %s335, %s338
      %p344 = scmp.eq.s32.totalorder %s31, 0
      %p345 = por %p343, %p344
      %p346 = scmp.ne.s32.totalorder %s335, %s338
      %p347 = scmp.eq.s32.totalorder %s36, 1
      %p348 = por %p346, %p347
      %p349 = scmp.ne.s32.totalorder %s338, %s339
      %p350 = scmp.eq.s32.totalorder %s36, 0
      %p351 = por %p349, %p350
      %p352 = scmp.ne.s32.totalorder %s338, %s339
      %p353 = scmp.eq.s32.totalorder %s37, 1
      %p354 = por %p352, %p353
      %p356 = scmp.ne.s32.totalorder %s339, %s355
      %p357 = scmp.eq.s32.totalorder %s37, 0
      %p358 = por %p356, %p357
      %s359 = ssub.s32 %s38, %s50
      %s360 = ssub.s32 %s39, %s46
      %s361 = sor.u32 %s359, %s360
      %p362 = scmp.eq.s32.totalorder %s361, 0
      %s364 = sadd.s32 %s363, 1
      %s365 = scalar_select %p362, %s363, %s364
      %p368 = pneg %p362
      %p369 = scmp.eq.s32.totalorder %s31, 1
      %p370 = por %p368, %p369
      %p371 = scmp.ne.s32.totalorder %s363, %s366
      %p372 = scmp.eq.s32.totalorder %s31, 0
      %p373 = por %p371, %p372
      %p374 = scmp.ne.s32.totalorder %s363, %s366
      %p375 = scmp.eq.s32.totalorder %s36, 1
      %p376 = por %p374, %p375
      %p377 = scmp.ne.s32.totalorder %s366, %s367
      %p378 = scmp.eq.s32.totalorder %s36, 0
      %p379 = por %p377, %p378
      %p380 = scmp.ne.s32.totalorder %s366, %s367
      %p381 = scmp.eq.s32.totalorder %s37, 1
      %p382 = por %p380, %p381
      %p384 = scmp.ne.s32.totalorder %s367, %s383
      %p385 = scmp.eq.s32.totalorder %s37, 0
      %p386 = por %p384, %p385
      %p387 = scmp.le.s32.totalorder 1, %s31
      %p388 = scmp.lt.s32.totalorder %s31, 3
      %p389 = pnand %p387, %p388
      %p390 = pneg %p389
      // Predicated region
      $region9: #{tpu_custom_call.1} parent=5 // pred_check
        _
      $region10: #{tpu_custom_call.1} parent=5 // pred_check_branch
        %392 = sbr.rel (%p389) target = $region12
      $region11: #{tpu_custom_call.1} parent=5 // pred_region
        %s393 = ssub.s32 %s31, 1
        // Predicated region
        $region13: #{tpu_custom_call.1} parent=11 // pred_check
          %p394 = pneg %p120
        $region14: #{tpu_custom_call.1} parent=11 // pred_check_branch
          %396 = sbr.rel (%p394) target = $region16
        $region15: #{tpu_custom_call.1} parent=11 // pred_region
          %s398 = ssub.s32 256, 256
          %399 = vsyncadd [#allocation3], %s398
          %s400 = sshll.u32 [#allocation2], 4
          %s401 = int_to_ptr.vmem [resolvable:$true] %s400
          %406 = dma.hbm_to_vmem [thread:$0]  %s2, 256, %s401, [#allocation3], 128, 128, 8
        $region16: #{tpu_custom_call.1} parent=11 // pred_fallthru
          _
        // Predicated region
        $region17: #{tpu_custom_call.1} parent=11 // pred_check
          %p407 = pneg %p141
        $region18: #{tpu_custom_call.1} parent=11 // pred_check_branch
          %409 = sbr.rel (%p407) target = $region20
        $region19: #{tpu_custom_call.1} parent=11 // pred_region
          _
        $region20: #{tpu_custom_call.1} parent=11 // pred_fallthru
          _
        // Predicated region
        $region21: #{tpu_custom_call.1} parent=11 // pred_check
          %p410 = pneg %p162
        $region22: #{tpu_custom_call.1} parent=11 // pred_check_branch
          %412 = sbr.rel (%p410) target = $region24
        $region23: #{tpu_custom_call.1} parent=11 // pred_region
          _
        $region24: #{tpu_custom_call.1} parent=11 // pred_fallthru
          _
        // Predicated region
        $region25: #{tpu_custom_call.1} parent=11 // pred_check
          %p413 = pneg %p183
        $region26: #{tpu_custom_call.1} parent=11 // pred_check_branch
          %415 = sbr.rel (%p413) target = $region28
        $region27: #{tpu_custom_call.1} parent=11 // pred_region
          _
        $region28: #{tpu_custom_call.1} parent=11 // pred_fallthru
          _
        // Predicated region
        $region29: #{tpu_custom_call.1} parent=11 // pred_check
          %p416 = pneg %p204
        $region30: #{tpu_custom_call.1} parent=11 // pred_check_branch
          %418 = sbr.rel (%p416) target = $region32
        $region31: #{tpu_custom_call.1} parent=11 // pred_region
          %s420 = ssub.s32 256, 256
          %421 = vsyncadd [#allocation6], %s420
          %s422 = sshll.u32 [#allocation5], 4
          %s423 = int_to_ptr.vmem [resolvable:$true] %s422
          %428 = dma.hbm_to_vmem [thread:$0]  %s6, 256, %s423, [#allocation6], 128, 128, 8
        $region32: #{tpu_custom_call.1} parent=11 // pred_fallthru
          _
        // Predicated region
        $region33: #{tpu_custom_call.1} parent=11 // pred_check
          %p429 = pneg %p225
        $region34: #{tpu_custom_call.1} parent=11 // pred_check_branch
          %431 = sbr.rel (%p429) target = $region36
        $region35: #{tpu_custom_call.1} parent=11 // pred_region
          _
        $region36: #{tpu_custom_call.1} parent=11 // pred_fallthru
          _
        // Predicated region
        $region37: #{tpu_custom_call.1} parent=11 // pred_check
          %p432 = pneg %p246
        $region38: #{tpu_custom_call.1} parent=11 // pred_check_branch
          %434 = sbr.rel (%p432) target = $region40
        $region39: #{tpu_custom_call.1} parent=11 // pred_region
          _
        $region40: #{tpu_custom_call.1} parent=11 // pred_fallthru
          _
        // Predicated region
        $region41: #{tpu_custom_call.1} parent=11 // pred_check
          %p435 = pneg %p267
        $region42: #{tpu_custom_call.1} parent=11 // pred_check_branch
          %437 = sbr.rel (%p435) target = $region44
        $region43: #{tpu_custom_call.1} parent=11 // pred_region
          _
        $region44: #{tpu_custom_call.1} parent=11 // pred_fallthru
          _
      $region12: #{tpu_custom_call.1} parent=5 // pred_fallthru
        _
      %p438 = scmp.lt.s32.totalorder %s31, 2
      // Predicated region
      $region45: #{tpu_custom_call.1} parent=5 // pred_check
        %p439 = pneg %p438
      $region46: #{tpu_custom_call.1} parent=5 // pred_check_branch
        %441 = sbr.rel (%p439) target = $region48
      $region47: #{tpu_custom_call.1} parent=5 // pred_region
        // Predicated region
        $region49: #{tpu_custom_call.1} parent=47 // pred_check
          %p442 = pneg %p65
        $region50: #{tpu_custom_call.1} parent=47 // pred_check_branch
          %444 = sbr.rel (%p442) target = $region52
        $region51: #{tpu_custom_call.1} parent=47 // pred_region
          %s445 = smul.u32 2, %s39
          %p446 = scmp.lt.s32.totalorder %s38, 1
          %s447 = scalar_select %p446, %s38, 1
          %p448 = scmp.lt.s32.totalorder %s445, 1
          %s449 = scalar_select %p448, %s445, 1
          %s450 = smul.addr %s447, 2
          %s451 = sadd.s32 %s449, %s450
          %s452 = smul.addr %s451, 8
          %s453 = scalar_lea.vmem %s0, %s452
          %s454 = smul.u32 2, %s39
        $region52: #{tpu_custom_call.1} parent=47 // pred_fallthru
          _
        // Predicated region
        $region53: #{tpu_custom_call.1} parent=47 // pred_check
          %p455 = pneg %p93
        $region54: #{tpu_custom_call.1} parent=47 // pred_check_branch
          %457 = sbr.rel (%p455) target = $region56
        $region55: #{tpu_custom_call.1} parent=47 // pred_region
          %s458 = smul.u32 2, %s39
          %p459 = scmp.lt.s32.totalorder %s38, 1
          %s460 = scalar_select %p459, %s38, 1
          %p461 = scmp.lt.s32.totalorder %s458, 1
          %s462 = scalar_select %p461, %s458, 1
          %s463 = smul.addr %s460, 2
          %s464 = sadd.s32 %s462, %s463
          %s465 = smul.addr %s464, 8
          %s466 = scalar_lea.vmem %s1, %s465
          %s467 = smul.u32 2, %s39
        $region56: #{tpu_custom_call.1} parent=47 // pred_fallthru
          _
      $region48: #{tpu_custom_call.1} parent=5 // pred_fallthru
        _
      %p468 = scmp.le.s32.totalorder 1, %s31
      %p469 = scmp.lt.s32.totalorder %s31, 3
      %p470 = pnand %p468, %p469
      %p471 = pneg %p470
      // Predicated region
      $region57: #{tpu_custom_call.1} parent=5 // pred_check
        _
      $region58: #{tpu_custom_call.1} parent=5 // pred_check_branch
        %473 = sbr.rel (%p470) target = $region60
      $region59: #{tpu_custom_call.1} parent=5 // pred_region
        %s474 = ssub.s32 %s31, 1
        // Predicated region
        $region61: #{tpu_custom_call.1} parent=59 // pred_check
          %p475 = pneg %p120
        $region62: #{tpu_custom_call.1} parent=59 // pred_check_branch
          %477 = sbr.rel (%p475) target = $region64
        $region63: #{tpu_custom_call.1} parent=59 // pred_region
          %478 = dma.done [#allocation3], 256
        $region64: #{tpu_custom_call.1} parent=59 // pred_fallthru
          _
        // Predicated region
        $region65: #{tpu_custom_call.1} parent=59 // pred_check
          %p479 = pneg %p204
        $region66: #{tpu_custom_call.1} parent=59 // pred_check_branch
          %481 = sbr.rel (%p479) target = $region68
        $region67: #{tpu_custom_call.1} parent=59 // pred_region
          %482 = dma.done [#allocation6], 256
        $region68: #{tpu_custom_call.1} parent=59 // pred_fallthru
          _
        %s483 = smul.u32 2, %s41
        %p484 = scmp.lt.s32.totalorder %s40, 1
        %s485 = scalar_select %p484, %s40, 1
        %p486 = scmp.lt.s32.totalorder %s483, 1
        %s487 = scalar_select %p486, %s483, 1
        %s488 = smul.addr %s485, 2
        %s489 = sadd.s32 %s487, %s488
        %s490 = smul.addr %s489, 8
        %s491 = scalar_lea.vmem %s0, %s490
        %p492 = pneg %p71
        %p493 = pneg %p68
        %s494 = smul.u32 2, %s41
        %p495 = scmp.lt.s32.totalorder %s40, 1
        %s496 = scalar_select %p495, %s40, 1
        %p497 = scmp.lt.s32.totalorder %s494, 1
        %s498 = scalar_select %p497, %s494, 1
        %s499 = smul.addr %s496, 2
        %s500 = sadd.s32 %s498, %s499
        %s501 = smul.addr %s500, 8
        %s502 = scalar_lea.vmem %s1, %s501
        %p503 = pneg %p99
        %p504 = pneg %p96
        %p505 = pneg %p120
        %p506 = pneg %p117
        %p507 = pneg %p141
        %p508 = pneg %p138
        %p509 = pneg %p162
        %p510 = pneg %p159
        %p511 = pneg %p183
        %p512 = pneg %p180
        %p513 = pneg %p204
        %p514 = pneg %p201
        %p515 = pneg %p225
        %p516 = pneg %p222
        %p517 = pneg %p246
        %p518 = pneg %p243
        %p519 = pneg %p267
        %p520 = pneg %p264
        %p521 = pneg %p295
        %p522 = pneg %p292
        %s523 = sand.u32 %s282, 1
        %s524 = scalar_lea.sflag [#allocation4], %s523
        %s525 = sand.u32 %s282, 1
        %s526 = smul.addr %s525, 16
        %s527 = scalar_lea.vmem [#allocation7], %s526
        %p528 = pneg %p323
        %p529 = pneg %p320
        %s530 = sand.u32 %s36, 1
        %s531 = scalar_lea.sflag [#allocation9], %s530
        %s532 = sand.u32 %s310, 1
        %s533 = smul.addr %s532, 16
        %s534 = scalar_lea.vmem [#allocation8], %s533
        %p535 = pneg %p351
        %p536 = pneg %p348
        %s537 = sand.u32 %s36, 1
        %s538 = scalar_lea.sflag [#allocation9], %s537
        %s539 = sand.u32 %s338, 1
        %s540 = smul.addr %s539, 16
        %s541 = scalar_lea.vmem [#allocation10], %s540
        %p542 = pneg %p379
        %p543 = pneg %p376
        %s544 = sand.u32 %s366, 1
        %s545 = scalar_lea.sflag [#allocation12], %s544
        %s546 = sand.u32 %s366, 1
        %s547 = smul.addr %s546, 16
        %s548 = scalar_lea.vmem [#allocation11], %s547
        %s549 = smul.u32 2, %s41
        %p550 = scmp.lt.s32.totalorder %s40, 1
        %s551 = scalar_select %p550, %s40, 1
        %p552 = scmp.lt.s32.totalorder %s549, 1
        %s553 = scalar_select %p552, %s549, 1
        %s554 = smul.addr %s551, 2
        %s555 = sadd.s32 %s553, %s554
        %s556 = smul.addr %s555, 8
        %s557 = scalar_lea.vmem %s0, %s556
        %s558 = smul.u32 2, %s41
        %s559 = smul.u32 2, %s41
        %p560 = scmp.lt.s32.totalorder %s40, 1
        %s561 = scalar_select %p560, %s40, 1
        %p562 = scmp.lt.s32.totalorder %s559, 1
        %s563 = scalar_select %p562, %s559, 1
        %s564 = smul.addr %s561, 2
        %s565 = sadd.s32 %s563, %s564
        %s566 = smul.addr %s565, 8
        %s567 = scalar_lea.vmem %s1, %s566
        %s568 = smul.u32 2, %s41
        %s569 = smul.u32 2, %s41
        %s570 = smul.u32 2, %s41
        %s571 = smul.u32 2, %s41
        %s572 = smul.u32 2, %s41
        %v573 = vld [vmem:[%s557] sm:$0xff]
        %v574 = vld [vmem:[%s557 + $0x8] sm:$0xff]
        %v575 = vld [vmem:[%s567] sm:$0xff]
        %v576 = vld [vmem:[%s567 + $0x8] sm:$0xff]
        %v577 = vxor.u32 %v573, 2147483648
        %v578 = vxor.u32 %v574, 2147483648
        %v579 = vmul.f32 %v577, 1.442695
        %v580 = vpow.pop %v579
        %v581 = vmul.f32 %v578, 1.442695
        %v582 = vpow.pop %v581
        %v583 = vadd.f32 %v580, 1.0
        %v584 = vadd.f32 %v582, 1.0
        %v585 = vrcp.pop %v583
        %v586 = vmul.f32 1.0, %v585
        %v587 = vrcp.pop %v584
        %v588 = vmul.f32 1.0, %v587
        %v589 = vmul.f32 %v573, %v586
        %v590 = vmul.f32 %v574, %v588
        %v591 = vsub.f32 %v589, %v573
        %v592 = vsub.f32 %v590, %v574
        %v593 = vld [vmem:[#allocation2] sm:$0xff]
        %v594 = vld [vmem:[%s3] sm:$0xff]
        %596 = vset.pattern.permute.xlu0 0
        %597 = vperm.xlu0 %596, %v594
        %v598 = vpop.permute.xlu0 %597
        %vm600 = vcmask 130048
        %v602 = vsel %vm600, %v593, 0
        %604 = vmatprep.subr.mxu0 %v590
        %605 = vmatpush1.msra.mxu0 %v589
        %606 = vmatprep.subr.mxu0 %v592
        %607 = vmatpush1.msra.mxu0 %v591
        %608 = vmatprep.subr.mxu0 0.0
        %609 = vmatpush1.msra.mxu0 0.0
        %610 = vmatprep.subr.mxu0 0.0
        %611 = vmatpush1.msra.mxu0 0.0
        %612 = vmatprep.subr.mxu0 0.0
        %613 = vmatpush1.msra.mxu0 0.0
        %614 = vmatprep.subr.mxu0 0.0
        %615 = vmatpush1.msra.mxu0 0.0
        %616 = vmatprep.subr.mxu0 0.0
        %617 = vmatpush1.msra.mxu0 0.0
        %618 = vmatprep.subr.mxu0 0.0
        %619 = vmatpush1.msra.mxu0 0.0
        %620 = vmatprep.subr.mxu0 0.0
        %621 = vmatpush1.msra.mxu0 0.0
        %622 = vmatprep.subr.mxu0 0.0
        %623 = vmatpush1.msra.mxu0 0.0
        %624 = vmatprep.subr.mxu0 0.0
        %625 = vmatpush1.msra.mxu0 0.0
        %626 = vmatprep.subr.mxu0 0.0
        %627 = vmatpush1.msra.mxu0 0.0
        %628 = vmatprep.subr.mxu0 0.0
        %629 = vmatpush1.msra.mxu0 0.0
        %630 = vmatprep.subr.mxu0 0.0
        %631 = vmatpush1.msra.mxu0 0.0
        %632 = vmatprep.subr.mxu0 0.0
        %633 = vmatpush1.msra.mxu0 0.0
        %634 = vmatprep.subr.mxu0 0.0
        %635 = vmatpush1.msra.mxu0 0.0
        %636 = vmatprep.subr.mxu0 0.0
        %637 = vmatpush1.msra.mxu0 0.0
        %638 = vmatprep.subr.mxu0 0.0
        %639 = vmatpush1.msra.mxu0 0.0
        %640 = vmatprep.subr.mxu0 0.0
        %641 = vmatpush1.msra.mxu0 0.0
        %642 = vmatprep.subr.mxu0 0.0
        %643 = vmatpush1.msra.mxu0 0.0
        %644 = vmatprep.subr.mxu0 0.0
        %645 = vmatpush1.msra.mxu0 0.0
        %646 = vmatprep.subr.mxu0 0.0
        %647 = vmatpush1.msra.mxu0 0.0
        %648 = vmatprep.subr.mxu0 0.0
        %649 = vmatpush1.msra.mxu0 0.0
        %650 = vmatprep.subr.mxu0 0.0
        %651 = vmatpush1.msra.mxu0 0.0
        %652 = vmatprep.subr.mxu0 0.0
        %653 = vmatpush1.msra.mxu0 0.0
        %654 = vmatprep.subr.mxu0 0.0
        %655 = vmatpush1.msra.mxu0 0.0
        %656 = vmatprep.subr.mxu0 0.0
        %657 = vmatpush1.msra.mxu0 0.0
        %658 = vmatprep.subr.mxu0 0.0
        %659 = vmatpush1.msra.mxu0 0.0
        %660 = vmatprep.subr.mxu0 0.0
        %661 = vmatpush1.msra.mxu0 0.0
        %662 = vmatprep.subr.mxu0 0.0
        %663 = vmatpush1.msra.mxu0 0.0
        %664 = vmatprep.subr.mxu0 0.0
        %665 = vmatpush1.msra.mxu0 0.0
        %666 = vmatprep.subr.mxu0 0.0
        %667 = vmatpush1.msra.mxu0 0.0
        %668 = vmatprep.mubr.f32.mxu0 0.0
        %669 = vmatmul.mubr.f32.gmra.mrb[0].mxu0 %v602
        %v670 = vpop.f32.mrb[0].mxu0
        %v671 = vadd.f32 %v598, %v670
        %v672 = vpop.f32.mrb[0].mxu0
        %v673 = vadd.f32 %v598, %v672
        %674 = vdwg.mxu0
        %v675 = vxor.u32 %v671, 2147483648
        %v676 = vxor.u32 %v673, 2147483648
        %v677 = vmul.f32 %v675, 1.442695
        %v678 = vpow.pop %v677
        %v679 = vmul.f32 %v676, 1.442695
        %v680 = vpow.pop %v679
        %v681 = vadd.f32 %v678, 1.0
        %v682 = vadd.f32 %v680, 1.0
        %v683 = vrcp.pop %v681
        %v684 = vmul.f32 1.0, %v683
        %v685 = vrcp.pop %v682
        %v686 = vmul.f32 1.0, %v685
        %v687 = vmul.f32 %v671, %v684
        %v688 = vmul.f32 %v673, %v686
        %v689 = vsub.f32 %v687, %v671
        %v690 = vsub.f32 %v688, %v673
        %v691 = vld [vmem:[%s4] sm:$0xff]
        %v692 = vld [vmem:[%s4 + $0x8] sm:$0xff]
        %v693 = vld [vmem:[%s5] sm:$0xff]
        %v694 = vld [vmem:[%s5 + $0x8] sm:$0xff]
        %696 = vset.pattern.permute.xlu0 0
        %697 = vperm.xlu0 %696, %v693
        %v698 = vpop.permute.xlu0 %697
        %701 = vset.pattern.permute.xlu0 0
        %702 = vperm.xlu0 %701, %v694
        %v703 = vpop.permute.xlu0 %702
        %v706 = vsel %vm600, %v691, 0
        %v709 = vsel %vm600, %v692, 0
        %711 = vmatprep.subr.mxu0 %v688
        %712 = vmatpush1.msra.mxu0 %v687
        %713 = vmatprep.subr.mxu0 %v690
        %714 = vmatpush1.msra.mxu0 %v689
        %715 = vmatprep.subr.mxu0 0.0
        %716 = vmatpush1.msra.mxu0 0.0
        %717 = vmatprep.subr.mxu0 0.0
        %718 = vmatpush1.msra.mxu0 0.0
        %719 = vmatprep.subr.mxu0 0.0
        %720 = vmatpush1.msra.mxu0 0.0
        %721 = vmatprep.subr.mxu0 0.0
        %722 = vmatpush1.msra.mxu0 0.0
        %723 = vmatprep.subr.mxu0 0.0
        %724 = vmatpush1.msra.mxu0 0.0
        %725 = vmatprep.subr.mxu0 0.0
        %726 = vmatpush1.msra.mxu0 0.0
        %727 = vmatprep.subr.mxu0 0.0
        %728 = vmatpush1.msra.mxu0 0.0
        %729 = vmatprep.subr.mxu0 0.0
        %730 = vmatpush1.msra.mxu0 0.0
        %731 = vmatprep.subr.mxu0 0.0
        %732 = vmatpush1.msra.mxu0 0.0
        %733 = vmatprep.subr.mxu0 0.0
        %734 = vmatpush1.msra.mxu0 0.0
        %735 = vmatprep.subr.mxu0 0.0
        %736 = vmatpush1.msra.mxu0 0.0
        %737 = vmatprep.subr.mxu0 0.0
        %738 = vmatpush1.msra.mxu0 0.0
        %739 = vmatprep.subr.mxu0 0.0
        %740 = vmatpush1.msra.mxu0 0.0
        %741 = vmatprep.subr.mxu0 0.0
        %742 = vmatpush1.msra.mxu0 0.0
        %743 = vmatprep.subr.mxu0 0.0
        %744 = vmatpush1.msra.mxu0 0.0
        %745 = vmatprep.subr.mxu0 0.0
        %746 = vmatpush1.msra.mxu0 0.0
        %747 = vmatprep.subr.mxu0 0.0
        %748 = vmatpush1.msra.mxu0 0.0
        %749 = vmatprep.subr.mxu0 0.0
        %750 = vmatpush1.msra.mxu0 0.0
        %751 = vmatprep.subr.mxu0 0.0
        %752 = vmatpush1.msra.mxu0 0.0
        %753 = vmatprep.subr.mxu0 0.0
        %754 = vmatpush1.msra.mxu0 0.0
        %755 = vmatprep.subr.mxu0 0.0
        %756 = vmatpush1.msra.mxu0 0.0
        %757 = vmatprep.subr.mxu0 0.0
        %758 = vmatpush1.msra.mxu0 0.0
        %759 = vmatprep.subr.mxu0 0.0
        %760 = vmatpush1.msra.mxu0 0.0
        %761 = vmatprep.subr.mxu0 0.0
        %762 = vmatpush1.msra.mxu0 0.0
        %763 = vmatprep.subr.mxu0 0.0
        %764 = vmatpush1.msra.mxu0 0.0
        %765 = vmatprep.subr.mxu0 0.0
        %766 = vmatpush1.msra.mxu0 0.0
        %767 = vmatprep.subr.mxu0 0.0
        %768 = vmatpush1.msra.mxu0 0.0
        %769 = vmatprep.subr.mxu0 0.0
        %770 = vmatpush1.msra.mxu0 0.0
        %771 = vmatprep.subr.mxu0 0.0
        %772 = vmatpush1.msra.mxu0 0.0
        %773 = vmatprep.subr.mxu0 0.0
        %774 = vmatpush1.msra.mxu0 0.0
        %775 = vmatprep.mubr.f32.mxu0 0.0
        %776 = vmatmul.mubr.f32.gmra.mrb[0].mxu0 %v706
        %v777 = vpop.f32.mrb[0].mxu0
        %v778 = vadd.f32 %v698, %v777
        %v779 = vpop.f32.mrb[0].mxu0
        %v780 = vadd.f32 %v698, %v779
        %781 = vmatprep.mubr.f32.mxu0 0.0
        %782 = vmatmul.mubr.f32.gmra.mrb[0].mxu0 %v709
        %v783 = vpop.f32.mrb[0].mxu0
        %v784 = vadd.f32 %v703, %v783
        %v785 = vpop.f32.mrb[0].mxu0
        %v786 = vadd.f32 %v703, %v785
        %787 = vdwg.mxu0
        %v788 = vxor.u32 %v784, 2147483648
        %v789 = vxor.u32 %v786, 2147483648
        %v790 = vmul.f32 %v788, 1.442695
        %v791 = vpow.pop %v790
        %v792 = vmul.f32 %v789, 1.442695
        %v793 = vpow.pop %v792
        %v794 = vadd.f32 %v791, 1.0
        %v795 = vadd.f32 %v793, 1.0
        %v796 = vrcp.pop %v794
        %v797 = vmul.f32 1.0, %v796
        %v798 = vrcp.pop %v795
        %v799 = vmul.f32 1.0, %v798
        %v800 = vmul.f32 %v778, %v797
        %v801 = vmul.f32 %v780, %v799
        %v802 = vadd.f32 %v573, %v800
        %v803 = vadd.f32 %v574, %v801
        %804 = vst [vmem:[%s527] sm:$0xff] %v802
        %805 = vst [vmem:[%s527 + $0x8] sm:$0xff] %v803
        %v806 = vxor.u32 %v802, 2147483648
        %v807 = vxor.u32 %v803, 2147483648
        %v808 = vmul.f32 %v806, 1.442695
        %v809 = vpow.pop %v808
        %v810 = vmul.f32 %v807, 1.442695
        %v811 = vpow.pop %v810
        %v812 = vadd.f32 %v809, 1.0
        %v813 = vadd.f32 %v811, 1.0
        %v814 = vrcp.pop %v812
        %v815 = vmul.f32 1.0, %v814
        %v816 = vrcp.pop %v813
        %v817 = vmul.f32 1.0, %v816
        %v818 = vmul.f32 %v802, %v815
        %v819 = vmul.f32 %v803, %v817
        %v820 = vsub.f32 %v818, %v802
        %v821 = vsub.f32 %v819, %v803
        %v822 = vxor.u32 %v575, 2147483648
        %v823 = vxor.u32 %v576, 2147483648
        %v824 = vmul.f32 %v822, 1.442695
        %v825 = vpow.pop %v824
        %v826 = vmul.f32 %v823, 1.442695
        %v827 = vpow.pop %v826
        %v828 = vadd.f32 %v825, 1.0
        %v829 = vadd.f32 %v827, 1.0
        %v830 = vrcp.pop %v828
        %v831 = vmul.f32 1.0, %v830
        %v832 = vrcp.pop %v829
        %v833 = vmul.f32 1.0, %v832
        %v834 = vmul.f32 %v575, %v831
        %v835 = vmul.f32 %v576, %v833
        %v836 = vsub.f32 %v834, %v575
        %v837 = vsub.f32 %v835, %v576
        %v838 = vld [vmem:[#allocation5] sm:$0xff]
        %v839 = vld [vmem:[%s7] sm:$0xff]
        %841 = vset.pattern.permute.xlu0 0
        %842 = vperm.xlu0 %841, %v839
        %v843 = vpop.permute.xlu0 %842
        %vm845 = vcmask 261120
        %v847 = vsel %vm845, %v838, 0
        %849 = vmatprep.subr.mxu0 %v835
        %850 = vmatpush1.msra.mxu0 %v834
        %851 = vmatprep.subr.mxu0 %v837
        %852 = vmatpush1.msra.mxu0 %v836
        %853 = vmatprep.subr.mxu0 %v819
        %854 = vmatpush1.msra.mxu0 %v818
        %855 = vmatprep.subr.mxu0 %v821
        %856 = vmatpush1.msra.mxu0 %v820
        %857 = vmatprep.subr.mxu0 0.0
        %858 = vmatpush1.msra.mxu0 0.0
        %859 = vmatprep.subr.mxu0 0.0
        %860 = vmatpush1.msra.mxu0 0.0
        %861 = vmatprep.subr.mxu0 0.0
        %862 = vmatpush1.msra.mxu0 0.0
        %863 = vmatprep.subr.mxu0 0.0
        %864 = vmatpush1.msra.mxu0 0.0
        %865 = vmatprep.subr.mxu0 0.0
        %866 = vmatpush1.msra.mxu0 0.0
        %867 = vmatprep.subr.mxu0 0.0
        %868 = vmatpush1.msra.mxu0 0.0
        %869 = vmatprep.subr.mxu0 0.0
        %870 = vmatpush1.msra.mxu0 0.0
        %871 = vmatprep.subr.mxu0 0.0
        %872 = vmatpush1.msra.mxu0 0.0
        %873 = vmatprep.subr.mxu0 0.0
        %874 = vmatpush1.msra.mxu0 0.0
        %875 = vmatprep.subr.mxu0 0.0
        %876 = vmatpush1.msra.mxu0 0.0
        %877 = vmatprep.subr.mxu0 0.0
        %878 = vmatpush1.msra.mxu0 0.0
        %879 = vmatprep.subr.mxu0 0.0
        %880 = vmatpush1.msra.mxu0 0.0
        %881 = vmatprep.subr.mxu0 0.0
        %882 = vmatpush1.msra.mxu0 0.0
        %883 = vmatprep.subr.mxu0 0.0
        %884 = vmatpush1.msra.mxu0 0.0
        %885 = vmatprep.subr.mxu0 0.0
        %886 = vmatpush1.msra.mxu0 0.0
        %887 = vmatprep.subr.mxu0 0.0
        %888 = vmatpush1.msra.mxu0 0.0
        %889 = vmatprep.subr.mxu0 0.0
        %890 = vmatpush1.msra.mxu0 0.0
        %891 = vmatprep.subr.mxu0 0.0
        %892 = vmatpush1.msra.mxu0 0.0
        %893 = vmatprep.subr.mxu0 0.0
        %894 = vmatpush1.msra.mxu0 0.0
        %895 = vmatprep.subr.mxu0 0.0
        %896 = vmatpush1.msra.mxu0 0.0
        %897 = vmatprep.subr.mxu0 0.0
        %898 = vmatpush1.msra.mxu0 0.0
        %899 = vmatprep.subr.mxu0 0.0
        %900 = vmatpush1.msra.mxu0 0.0
        %901 = vmatprep.subr.mxu0 0.0
        %902 = vmatpush1.msra.mxu0 0.0
        %903 = vmatprep.subr.mxu0 0.0
        %904 = vmatpush1.msra.mxu0 0.0
        %905 = vmatprep.subr.mxu0 0.0
        %906 = vmatpush1.msra.mxu0 0.0
        %907 = vmatprep.subr.mxu0 0.0
        %908 = vmatpush1.msra.mxu0 0.0
        %909 = vmatprep.subr.mxu0 0.0
        %910 = vmatpush1.msra.mxu0 0.0
        %911 = vmatprep.subr.mxu0 0.0
        %912 = vmatpush1.msra.mxu0 0.0
        %913 = vmatprep.mubr.f32.mxu0 0.0
        %914 = vmatmul.mubr.f32.gmra.mrb[0].mxu0 %v847
        %v915 = vpop.f32.mrb[0].mxu0
        %v916 = vadd.f32 %v843, %v915
        %v917 = vpop.f32.mrb[0].mxu0
        %v918 = vadd.f32 %v843, %v917
        %919 = vdwg.mxu0
        %v920 = vxor.u32 %v916, 2147483648
        %v921 = vxor.u32 %v918, 2147483648
        %v922 = vmul.f32 %v920, 1.442695
        %v923 = vpow.pop %v922
        %v924 = vmul.f32 %v921, 1.442695
        %v925 = vpow.pop %v924
        %v926 = vadd.f32 %v923, 1.0
        %v927 = vadd.f32 %v925, 1.0
        %v928 = vrcp.pop %v926
        %v929 = vmul.f32 1.0, %v928
        %v930 = vrcp.pop %v927
        %v931 = vmul.f32 1.0, %v930
        %v932 = vmul.f32 %v916, %v929
        %v933 = vmul.f32 %v918, %v931
        %v934 = vsub.f32 %v932, %v916
        %v935 = vsub.f32 %v933, %v918
        %v936 = vld [vmem:[%s8] sm:$0xff]
        %v937 = vld [vmem:[%s8 + $0x8] sm:$0xff]
        %v938 = vld [vmem:[%s9] sm:$0xff]
        %v939 = vld [vmem:[%s9 + $0x8] sm:$0xff]
        %941 = vset.pattern.permute.xlu0 0
        %942 = vperm.xlu0 %941, %v938
        %v943 = vpop.permute.xlu0 %942
        %946 = vset.pattern.permute.xlu0 0
        %947 = vperm.xlu0 %946, %v939
        %v948 = vpop.permute.xlu0 %947
        %v951 = vsel %vm600, %v936, 0
        %v954 = vsel %vm600, %v937, 0
        %956 = vmatprep.subr.mxu0 %v933
        %957 = vmatpush1.msra.mxu0 %v932
        %958 = vmatprep.subr.mxu0 %v935
        %959 = vmatpush1.msra.mxu0 %v934
        %960 = vmatprep.subr.mxu0 0.0
        %961 = vmatpush1.msra.mxu0 0.0
        %962 = vmatprep.subr.mxu0 0.0
        %963 = vmatpush1.msra.mxu0 0.0
        %964 = vmatprep.subr.mxu0 0.0
        %965 = vmatpush1.msra.mxu0 0.0
        %966 = vmatprep.subr.mxu0 0.0
        %967 = vmatpush1.msra.mxu0 0.0
        %968 = vmatprep.subr.mxu0 0.0
        %969 = vmatpush1.msra.mxu0 0.0
        %970 = vmatprep.subr.mxu0 0.0
        %971 = vmatpush1.msra.mxu0 0.0
        %972 = vmatprep.subr.mxu0 0.0
        %973 = vmatpush1.msra.mxu0 0.0
        %974 = vmatprep.subr.mxu0 0.0
        %975 = vmatpush1.msra.mxu0 0.0
        %976 = vmatprep.subr.mxu0 0.0
        %977 = vmatpush1.msra.mxu0 0.0
        %978 = vmatprep.subr.mxu0 0.0
        %979 = vmatpush1.msra.mxu0 0.0
        %980 = vmatprep.subr.mxu0 0.0
        %981 = vmatpush1.msra.mxu0 0.0
        %982 = vmatprep.subr.mxu0 0.0
        %983 = vmatpush1.msra.mxu0 0.0
        %984 = vmatprep.subr.mxu0 0.0
        %985 = vmatpush1.msra.mxu0 0.0
        %986 = vmatprep.subr.mxu0 0.0
        %987 = vmatpush1.msra.mxu0 0.0
        %988 = vmatprep.subr.mxu0 0.0
        %989 = vmatpush1.msra.mxu0 0.0
        %990 = vmatprep.subr.mxu0 0.0
        %991 = vmatpush1.msra.mxu0 0.0
        %992 = vmatprep.subr.mxu0 0.0
        %993 = vmatpush1.msra.mxu0 0.0
        %994 = vmatprep.subr.mxu0 0.0
        %995 = vmatpush1.msra.mxu0 0.0
        %996 = vmatprep.subr.mxu0 0.0
        %997 = vmatpush1.msra.mxu0 0.0
        %998 = vmatprep.subr.mxu0 0.0
        %999 = vmatpush1.msra.mxu0 0.0
        %1000 = vmatprep.subr.mxu0 0.0
        %1001 = vmatpush1.msra.mxu0 0.0
        %1002 = vmatprep.subr.mxu0 0.0
        %1003 = vmatpush1.msra.mxu0 0.0
        %1004 = vmatprep.subr.mxu0 0.0
        %1005 = vmatpush1.msra.mxu0 0.0
        %1006 = vmatprep.subr.mxu0 0.0
        %1007 = vmatpush1.msra.mxu0 0.0
        %1008 = vmatprep.subr.mxu0 0.0
        %1009 = vmatpush1.msra.mxu0 0.0
        %1010 = vmatprep.subr.mxu0 0.0
        %1011 = vmatpush1.msra.mxu0 0.0
        %1012 = vmatprep.subr.mxu0 0.0
        %1013 = vmatpush1.msra.mxu0 0.0
        %1014 = vmatprep.subr.mxu0 0.0
        %1015 = vmatpush1.msra.mxu0 0.0
        %1016 = vmatprep.subr.mxu0 0.0
        %1017 = vmatpush1.msra.mxu0 0.0
        %1018 = vmatprep.subr.mxu0 0.0
        %1019 = vmatpush1.msra.mxu0 0.0
        %1020 = vmatprep.mubr.f32.mxu0 0.0
        %1021 = vmatmul.mubr.f32.gmra.mrb[0].mxu0 %v951
        %v1022 = vpop.f32.mrb[0].mxu0
        %v1023 = vadd.f32 %v943, %v1022
        %v1024 = vpop.f32.mrb[0].mxu0
        %v1025 = vadd.f32 %v943, %v1024
        %1026 = vmatprep.mubr.f32.mxu0 0.0
        %1027 = vmatmul.mubr.f32.gmra.mrb[0].mxu0 %v954
        %v1028 = vpop.f32.mrb[0].mxu0
        %v1029 = vadd.f32 %v948, %v1028
        %v1030 = vpop.f32.mrb[0].mxu0
        %v1031 = vadd.f32 %v948, %v1030
        %1032 = vdwg.mxu0
        %v1033 = vxor.u32 %v1029, 2147483648
        %v1034 = vxor.u32 %v1031, 2147483648
        %v1035 = vmul.f32 %v1033, 1.442695
        %v1036 = vpow.pop %v1035
        %v1037 = vmul.f32 %v1034, 1.442695
        %v1038 = vpow.pop %v1037
        %v1039 = vadd.f32 %v1036, 1.0
        %v1040 = vadd.f32 %v1038, 1.0
        %v1041 = vrcp.pop %v1039
        %v1042 = vmul.f32 1.0, %v1041
        %v1043 = vrcp.pop %v1040
        %v1044 = vmul.f32 1.0, %v1043
        %v1045 = vmul.f32 %v1023, %v1042
        %v1046 = vmul.f32 %v1025, %v1044
        %v1047 = vadd.f32 %v575, %v1045
        %v1048 = vadd.f32 %v576, %v1046
        %1049 = vst [vmem:[%s541] sm:$0xff] %v1047
        %1050 = vst [vmem:[%s541 + $0x8] sm:$0xff] %v1048
        %s1051 = scalar_lea.vmem [#allocation2], 8
        %v1052 = vld [vmem:[%s1051] sm:$0xff]
        %s1053 = scalar_lea.vmem %s3, 8
        %v1054 = vld [vmem:[%s1053] sm:$0xff]
        %1056 = vset.pattern.permute.xlu0 0
        %1057 = vperm.xlu0 %1056, %v1054
        %v1058 = vpop.permute.xlu0 %1057
        %v1061 = vsel %vm600, %v1052, 0
        %1063 = vmatprep.subr.mxu0 %v819
        %1064 = vmatpush1.msra.mxu0 %v818
        %1065 = vmatprep.subr.mxu0 %v821
        %1066 = vmatpush1.msra.mxu0 %v820
        %1067 = vmatprep.subr.mxu0 0.0
        %1068 = vmatpush1.msra.mxu0 0.0
        %1069 = vmatprep.subr.mxu0 0.0
        %1070 = vmatpush1.msra.mxu0 0.0
        %1071 = vmatprep.subr.mxu0 0.0
        %1072 = vmatpush1.msra.mxu0 0.0
        %1073 = vmatprep.subr.mxu0 0.0
        %1074 = vmatpush1.msra.mxu0 0.0
        %1075 = vmatprep.subr.mxu0 0.0
        %1076 = vmatpush1.msra.mxu0 0.0
        %1077 = vmatprep.subr.mxu0 0.0
        %1078 = vmatpush1.msra.mxu0 0.0
        %1079 = vmatprep.subr.mxu0 0.0
        %1080 = vmatpush1.msra.mxu0 0.0
        %1081 = vmatprep.subr.mxu0 0.0
        %1082 = vmatpush1.msra.mxu0 0.0
        %1083 = vmatprep.subr.mxu0 0.0
        %1084 = vmatpush1.msra.mxu0 0.0
        %1085 = vmatprep.subr.mxu0 0.0
        %1086 = vmatpush1.msra.mxu0 0.0
        %1087 = vmatprep.subr.mxu0 0.0
        %1088 = vmatpush1.msra.mxu0 0.0
        %1089 = vmatprep.subr.mxu0 0.0
        %1090 = vmatpush1.msra.mxu0 0.0
        %1091 = vmatprep.subr.mxu0 0.0
        %1092 = vmatpush1.msra.mxu0 0.0
        %1093 = vmatprep.subr.mxu0 0.0
        %1094 = vmatpush1.msra.mxu0 0.0
        %1095 = vmatprep.subr.mxu0 0.0
        %1096 = vmatpush1.msra.mxu0 0.0
        %1097 = vmatprep.subr.mxu0 0.0
        %1098 = vmatpush1.msra.mxu0 0.0
        %1099 = vmatprep.subr.mxu0 0.0
        %1100 = vmatpush1.msra.mxu0 0.0
        %1101 = vmatprep.subr.mxu0 0.0
        %1102 = vmatpush1.msra.mxu0 0.0
        %1103 = vmatprep.subr.mxu0 0.0
        %1104 = vmatpush1.msra.mxu0 0.0
        %1105 = vmatprep.subr.mxu0 0.0
        %1106 = vmatpush1.msra.mxu0 0.0
        %1107 = vmatprep.subr.mxu0 0.0
        %1108 = vmatpush1.msra.mxu0 0.0
        %1109 = vmatprep.subr.mxu0 0.0
        %1110 = vmatpush1.msra.mxu0 0.0
        %1111 = vmatprep.subr.mxu0 0.0
        %1112 = vmatpush1.msra.mxu0 0.0
        %1113 = vmatprep.subr.mxu0 0.0
        %1114 = vmatpush1.msra.mxu0 0.0
        %1115 = vmatprep.subr.mxu0 0.0
        %1116 = vmatpush1.msra.mxu0 0.0
        %1117 = vmatprep.subr.mxu0 0.0
        %1118 = vmatpush1.msra.mxu0 0.0
        %1119 = vmatprep.subr.mxu0 0.0
        %1120 = vmatpush1.msra.mxu0 0.0
        %1121 = vmatprep.subr.mxu0 0.0
        %1122 = vmatpush1.msra.mxu0 0.0
        %1123 = vmatprep.subr.mxu0 0.0
        %1124 = vmatpush1.msra.mxu0 0.0
        %1125 = vmatprep.subr.mxu0 0.0
        %1126 = vmatpush1.msra.mxu0 0.0
        %1127 = vmatprep.mubr.f32.mxu0 0.0
        %1128 = vmatmul.mubr.f32.gmra.mrb[0].mxu0 %v1061
        %v1129 = vpop.f32.mrb[0].mxu0
        %v1130 = vadd.f32 %v1058, %v1129
        %v1131 = vpop.f32.mrb[0].mxu0
        %v1132 = vadd.f32 %v1058, %v1131
        %1133 = vdwg.mxu0
        %v1134 = vxor.u32 %v1130, 2147483648
        %v1135 = vxor.u32 %v1132, 2147483648
        %v1136 = vmul.f32 %v1134, 1.442695
        %v1137 = vpow.pop %v1136
        %v1138 = vmul.f32 %v1135, 1.442695
        %v1139 = vpow.pop %v1138
        %v1140 = vadd.f32 %v1137, 1.0
        %v1141 = vadd.f32 %v1139, 1.0
        %v1142 = vrcp.pop %v1140
        %v1143 = vmul.f32 1.0, %v1142
        %v1144 = vrcp.pop %v1141
        %v1145 = vmul.f32 1.0, %v1144
        %v1146 = vmul.f32 %v1130, %v1143
        %v1147 = vmul.f32 %v1132, %v1145
        %v1148 = vsub.f32 %v1146, %v1130
        %v1149 = vsub.f32 %v1147, %v1132
        %s1150 = scalar_lea.vmem %s4, 16
        %v1151 = vld [vmem:[%s1150] sm:$0xff]
        %v1152 = vld [vmem:[%s1150 + $0x8] sm:$0xff]
        %s1153 = scalar_lea.vmem %s5, 16
        %v1154 = vld [vmem:[%s1153] sm:$0xff]
        %v1155 = vld [vmem:[%s1153 + $0x8] sm:$0xff]
        %1157 = vset.pattern.permute.xlu0 0
        %1158 = vperm.xlu0 %1157, %v1154
        %v1159 = vpop.permute.xlu0 %1158
        %1162 = vset.pattern.permute.xlu0 0
        %1163 = vperm.xlu0 %1162, %v1155
        %v1164 = vpop.permute.xlu0 %1163
        %v1167 = vsel %vm600, %v1151, 0
        %v1170 = vsel %vm600, %v1152, 0
        %1172 = vmatprep.subr.mxu0 %v1147
        %1173 = vmatpush1.msra.mxu0 %v1146
        %1174 = vmatprep.subr.mxu0 %v1149
        %1175 = vmatpush1.msra.mxu0 %v1148
        %1176 = vmatprep.subr.mxu0 0.0
        %1177 = vmatpush1.msra.mxu0 0.0
        %1178 = vmatprep.subr.mxu0 0.0
        %1179 = vmatpush1.msra.mxu0 0.0
        %1180 = vmatprep.subr.mxu0 0.0
        %1181 = vmatpush1.msra.mxu0 0.0
        %1182 = vmatprep.subr.mxu0 0.0
        %1183 = vmatpush1.msra.mxu0 0.0
        %1184 = vmatprep.subr.mxu0 0.0
        %1185 = vmatpush1.msra.mxu0 0.0
        %1186 = vmatprep.subr.mxu0 0.0
        %1187 = vmatpush1.msra.mxu0 0.0
        %1188 = vmatprep.subr.mxu0 0.0
        %1189 = vmatpush1.msra.mxu0 0.0
        %1190 = vmatprep.subr.mxu0 0.0
        %1191 = vmatpush1.msra.mxu0 0.0
        %1192 = vmatprep.subr.mxu0 0.0
        %1193 = vmatpush1.msra.mxu0 0.0
        %1194 = vmatprep.subr.mxu0 0.0
        %1195 = vmatpush1.msra.mxu0 0.0
        %1196 = vmatprep.subr.mxu0 0.0
        %1197 = vmatpush1.msra.mxu0 0.0
        %1198 = vmatprep.subr.mxu0 0.0
        %1199 = vmatpush1.msra.mxu0 0.0
        %1200 = vmatprep.subr.mxu0 0.0
        %1201 = vmatpush1.msra.mxu0 0.0
        %1202 = vmatprep.subr.mxu0 0.0
        %1203 = vmatpush1.msra.mxu0 0.0
        %1204 = vmatprep.subr.mxu0 0.0
        %1205 = vmatpush1.msra.mxu0 0.0
        %1206 = vmatprep.subr.mxu0 0.0
        %1207 = vmatpush1.msra.mxu0 0.0
        %1208 = vmatprep.subr.mxu0 0.0
        %1209 = vmatpush1.msra.mxu0 0.0
        %1210 = vmatprep.subr.mxu0 0.0
        %1211 = vmatpush1.msra.mxu0 0.0
        %1212 = vmatprep.subr.mxu0 0.0
        %1213 = vmatpush1.msra.mxu0 0.0
        %1214 = vmatprep.subr.mxu0 0.0
        %1215 = vmatpush1.msra.mxu0 0.0
        %1216 = vmatprep.subr.mxu0 0.0
        %1217 = vmatpush1.msra.mxu0 0.0
        %1218 = vmatprep.subr.mxu0 0.0
        %1219 = vmatpush1.msra.mxu0 0.0
        %1220 = vmatprep.subr.mxu0 0.0
        %1221 = vmatpush1.msra.mxu0 0.0
        %1222 = vmatprep.subr.mxu0 0.0
        %1223 = vmatpush1.msra.mxu0 0.0
        %1224 = vmatprep.subr.mxu0 0.0
        %1225 = vmatpush1.msra.mxu0 0.0
        %1226 = vmatprep.subr.mxu0 0.0
        %1227 = vmatpush1.msra.mxu0 0.0
        %1228 = vmatprep.subr.mxu0 0.0
        %1229 = vmatpush1.msra.mxu0 0.0
        %1230 = vmatprep.subr.mxu0 0.0
        %1231 = vmatpush1.msra.mxu0 0.0
        %1232 = vmatprep.subr.mxu0 0.0
        %1233 = vmatpush1.msra.mxu0 0.0
        %1234 = vmatprep.subr.mxu0 0.0
        %1235 = vmatpush1.msra.mxu0 0.0
        %1236 = vmatprep.mubr.f32.mxu0 0.0
        %1237 = vmatmul.mubr.f32.gmra.mrb[0].mxu0 %v1167
        %v1238 = vpop.f32.mrb[0].mxu0
        %v1239 = vadd.f32 %v1159, %v1238
        %v1240 = vpop.f32.mrb[0].mxu0
        %v1241 = vadd.f32 %v1159, %v1240
        %1242 = vmatprep.mubr.f32.mxu0 0.0
        %1243 = vmatmul.mubr.f32.gmra.mrb[0].mxu0 %v1170
        %v1244 = vpop.f32.mrb[0].mxu0
        %v1245 = vadd.f32 %v1164, %v1244
        %v1246 = vpop.f32.mrb[0].mxu0
        %v1247 = vadd.f32 %v1164, %v1246
        %1248 = vdwg.mxu0
        %v1249 = vxor.u32 %v1245, 2147483648
        %v1250 = vxor.u32 %v1247, 2147483648
        %v1251 = vmul.f32 %v1249, 1.442695
        %v1252 = vpow.pop %v1251
        %v1253 = vmul.f32 %v1250, 1.442695
        %v1254 = vpow.pop %v1253
        %v1255 = vadd.f32 %v1252, 1.0
        %v1256 = vadd.f32 %v1254, 1.0
        %v1257 = vrcp.pop %v1255
        %v1258 = vmul.f32 1.0, %v1257
        %v1259 = vrcp.pop %v1256
        %v1260 = vmul.f32 1.0, %v1259
        %v1261 = vmul.f32 %v1239, %v1258
        %v1262 = vmul.f32 %v1241, %v1260
        %v1263 = vadd.f32 %v802, %v1261
        %v1264 = vadd.f32 %v803, %v1262
        %1265 = vst [vmem:[%s534] sm:$0xff] %v1263
        %1266 = vst [vmem:[%s534 + $0x8] sm:$0xff] %v1264
        %v1267 = vxor.u32 %v1263, 2147483648
        %v1268 = vxor.u32 %v1264, 2147483648
        %v1269 = vmul.f32 %v1267, 1.442695
        %v1270 = vpow.pop %v1269
        %v1271 = vmul.f32 %v1268, 1.442695
        %v1272 = vpow.pop %v1271
        %v1273 = vadd.f32 %v1270, 1.0
        %v1274 = vadd.f32 %v1272, 1.0
        %v1275 = vrcp.pop %v1273
        %v1276 = vmul.f32 1.0, %v1275
        %v1277 = vrcp.pop %v1274
        %v1278 = vmul.f32 1.0, %v1277
        %v1279 = vmul.f32 %v1263, %v1276
        %v1280 = vmul.f32 %v1264, %v1278
        %v1281 = vsub.f32 %v1279, %v1263
        %v1282 = vsub.f32 %v1280, %v1264
        %v1283 = vxor.u32 %v1047, 2147483648
        %v1284 = vxor.u32 %v1048, 2147483648
        %v1285 = vmul.f32 %v1283, 1.442695
        %v1286 = vpow.pop %v1285
        %v1287 = vmul.f32 %v1284, 1.442695
        %v1288 = vpow.pop %v1287
        %v1289 = vadd.f32 %v1286, 1.0
        %v1290 = vadd.f32 %v1288, 1.0
        %v1291 = vrcp.pop %v1289
        %v1292 = vmul.f32 1.0, %v1291
        %v1293 = vrcp.pop %v1290
        %v1294 = vmul.f32 1.0, %v1293
        %v1295 = vmul.f32 %v1047, %v1292
        %v1296 = vmul.f32 %v1048, %v1294
        %v1297 = vsub.f32 %v1295, %v1047
        %v1298 = vsub.f32 %v1296, %v1048
        %s1299 = scalar_lea.vmem [#allocation5], 8
        %v1300 = vld [vmem:[%s1299] sm:$0xff]
        %s1301 = scalar_lea.vmem %s7, 8
        %v1302 = vld [vmem:[%s1301] sm:$0xff]
        %1304 = vset.pattern.permute.xlu0 0
        %1305 = vperm.xlu0 %1304, %v1302
        %v1306 = vpop.permute.xlu0 %1305
        %v1309 = vsel %vm845, %v1300, 0
        %1311 = vmatprep.subr.mxu0 %v1296
        %1312 = vmatpush1.msra.mxu0 %v1295
        %1313 = vmatprep.subr.mxu0 %v1298
        %1314 = vmatpush1.msra.mxu0 %v1297
        %1315 = vmatprep.subr.mxu0 %v1280
        %1316 = vmatpush1.msra.mxu0 %v1279
        %1317 = vmatprep.subr.mxu0 %v1282
        %1318 = vmatpush1.msra.mxu0 %v1281
        %1319 = vmatprep.subr.mxu0 0.0
        %1320 = vmatpush1.msra.mxu0 0.0
        %1321 = vmatprep.subr.mxu0 0.0
        %1322 = vmatpush1.msra.mxu0 0.0
        %1323 = vmatprep.subr.mxu0 0.0
        %1324 = vmatpush1.msra.mxu0 0.0
        %1325 = vmatprep.subr.mxu0 0.0
        %1326 = vmatpush1.msra.mxu0 0.0
        %1327 = vmatprep.subr.mxu0 0.0
        %1328 = vmatpush1.msra.mxu0 0.0
        %1329 = vmatprep.subr.mxu0 0.0
        %1330 = vmatpush1.msra.mxu0 0.0
        %1331 = vmatprep.subr.mxu0 0.0
        %1332 = vmatpush1.msra.mxu0 0.0
        %1333 = vmatprep.subr.mxu0 0.0
        %1334 = vmatpush1.msra.mxu0 0.0
        %1335 = vmatprep.subr.mxu0 0.0
        %1336 = vmatpush1.msra.mxu0 0.0
        %1337 = vmatprep.subr.mxu0 0.0
        %1338 = vmatpush1.msra.mxu0 0.0
        %1339 = vmatprep.subr.mxu0 0.0
        %1340 = vmatpush1.msra.mxu0 0.0
        %1341 = vmatprep.subr.mxu0 0.0
        %1342 = vmatpush1.msra.mxu0 0.0
        %1343 = vmatprep.subr.mxu0 0.0
        %1344 = vmatpush1.msra.mxu0 0.0
        %1345 = vmatprep.subr.mxu0 0.0
        %1346 = vmatpush1.msra.mxu0 0.0
        %1347 = vmatprep.subr.mxu0 0.0
        %1348 = vmatpush1.msra.mxu0 0.0
        %1349 = vmatprep.subr.mxu0 0.0
        %1350 = vmatpush1.msra.mxu0 0.0
        %1351 = vmatprep.subr.mxu0 0.0
        %1352 = vmatpush1.msra.mxu0 0.0
        %1353 = vmatprep.subr.mxu0 0.0
        %1354 = vmatpush1.msra.mxu0 0.0
        %1355 = vmatprep.subr.mxu0 0.0
        %1356 = vmatpush1.msra.mxu0 0.0
        %1357 = vmatprep.subr.mxu0 0.0
        %1358 = vmatpush1.msra.mxu0 0.0
        %1359 = vmatprep.subr.mxu0 0.0
        %1360 = vmatpush1.msra.mxu0 0.0
        %1361 = vmatprep.subr.mxu0 0.0
        %1362 = vmatpush1.msra.mxu0 0.0
        %1363 = vmatprep.subr.mxu0 0.0
        %1364 = vmatpush1.msra.mxu0 0.0
        %1365 = vmatprep.subr.mxu0 0.0
        %1366 = vmatpush1.msra.mxu0 0.0
        %1367 = vmatprep.subr.mxu0 0.0
        %1368 = vmatpush1.msra.mxu0 0.0
        %1369 = vmatprep.subr.mxu0 0.0
        %1370 = vmatpush1.msra.mxu0 0.0
        %1371 = vmatprep.subr.mxu0 0.0
        %1372 = vmatpush1.msra.mxu0 0.0
        %1373 = vmatprep.subr.mxu0 0.0
        %1374 = vmatpush1.msra.mxu0 0.0
        %1375 = vmatprep.mubr.f32.mxu0 0.0
        %1376 = vmatmul.mubr.f32.gmra.mrb[0].mxu0 %v1309
        %v1377 = vpop.f32.mrb[0].mxu0
        %v1378 = vadd.f32 %v1306, %v1377
        %v1379 = vpop.f32.mrb[0].mxu0
        %v1380 = vadd.f32 %v1306, %v1379
        %1381 = vdwg.mxu0
        %v1382 = vxor.u32 %v1378, 2147483648
        %v1383 = vxor.u32 %v1380, 2147483648
        %v1384 = vmul.f32 %v1382, 1.442695
        %v1385 = vpow.pop %v1384
        %v1386 = vmul.f32 %v1383, 1.442695
        %v1387 = vpow.pop %v1386
        %v1388 = vadd.f32 %v1385, 1.0
        %v1389 = vadd.f32 %v1387, 1.0
        %v1390 = vrcp.pop %v1388
        %v1391 = vmul.f32 1.0, %v1390
        %v1392 = vrcp.pop %v1389
        %v1393 = vmul.f32 1.0, %v1392
        %v1394 = vmul.f32 %v1378, %v1391
        %v1395 = vmul.f32 %v1380, %v1393
        %v1396 = vsub.f32 %v1394, %v1378
        %v1397 = vsub.f32 %v1395, %v1380
        %s1398 = scalar_lea.vmem %s8, 16
        %v1399 = vld [vmem:[%s1398] sm:$0xff]
        %v1400 = vld [vmem:[%s1398 + $0x8] sm:$0xff]
        %s1401 = scalar_lea.vmem %s9, 16
        %v1402 = vld [vmem:[%s1401] sm:$0xff]
        %v1403 = vld [vmem:[%s1401 + $0x8] sm:$0xff]
        %1405 = vset.pattern.permute.xlu0 0
        %1406 = vperm.xlu0 %1405, %v1402
        %v1407 = vpop.permute.xlu0 %1406
        %1410 = vset.pattern.permute.xlu0 0
        %1411 = vperm.xlu0 %1410, %v1403
        %v1412 = vpop.permute.xlu0 %1411
        %v1415 = vsel %vm600, %v1399, 0
        %v1418 = vsel %vm600, %v1400, 0
        %1420 = vmatprep.subr.mxu0 %v1395
        %1421 = vmatpush1.msra.mxu0 %v1394
        %1422 = vmatprep.subr.mxu0 %v1397
        %1423 = vmatpush1.msra.mxu0 %v1396
        %1424 = vmatprep.subr.mxu0 0.0
        %1425 = vmatpush1.msra.mxu0 0.0
        %1426 = vmatprep.subr.mxu0 0.0
        %1427 = vmatpush1.msra.mxu0 0.0
        %1428 = vmatprep.subr.mxu0 0.0
        %1429 = vmatpush1.msra.mxu0 0.0
        %1430 = vmatprep.subr.mxu0 0.0
        %1431 = vmatpush1.msra.mxu0 0.0
        %1432 = vmatprep.subr.mxu0 0.0
        %1433 = vmatpush1.msra.mxu0 0.0
        %1434 = vmatprep.subr.mxu0 0.0
        %1435 = vmatpush1.msra.mxu0 0.0
        %1436 = vmatprep.subr.mxu0 0.0
        %1437 = vmatpush1.msra.mxu0 0.0
        %1438 = vmatprep.subr.mxu0 0.0
        %1439 = vmatpush1.msra.mxu0 0.0
        %1440 = vmatprep.subr.mxu0 0.0
        %1441 = vmatpush1.msra.mxu0 0.0
        %1442 = vmatprep.subr.mxu0 0.0
        %1443 = vmatpush1.msra.mxu0 0.0
        %1444 = vmatprep.subr.mxu0 0.0
        %1445 = vmatpush1.msra.mxu0 0.0
        %1446 = vmatprep.subr.mxu0 0.0
        %1447 = vmatpush1.msra.mxu0 0.0
        %1448 = vmatprep.subr.mxu0 0.0
        %1449 = vmatpush1.msra.mxu0 0.0
        %1450 = vmatprep.subr.mxu0 0.0
        %1451 = vmatpush1.msra.mxu0 0.0
        %1452 = vmatprep.subr.mxu0 0.0
        %1453 = vmatpush1.msra.mxu0 0.0
        %1454 = vmatprep.subr.mxu0 0.0
        %1455 = vmatpush1.msra.mxu0 0.0
        %1456 = vmatprep.subr.mxu0 0.0
        %1457 = vmatpush1.msra.mxu0 0.0
        %1458 = vmatprep.subr.mxu0 0.0
        %1459 = vmatpush1.msra.mxu0 0.0
        %1460 = vmatprep.subr.mxu0 0.0
        %1461 = vmatpush1.msra.mxu0 0.0
        %1462 = vmatprep.subr.mxu0 0.0
        %1463 = vmatpush1.msra.mxu0 0.0
        %1464 = vmatprep.subr.mxu0 0.0
        %1465 = vmatpush1.msra.mxu0 0.0
        %1466 = vmatprep.subr.mxu0 0.0
        %1467 = vmatpush1.msra.mxu0 0.0
        %1468 = vmatprep.subr.mxu0 0.0
        %1469 = vmatpush1.msra.mxu0 0.0
        %1470 = vmatprep.subr.mxu0 0.0
        %1471 = vmatpush1.msra.mxu0 0.0
        %1472 = vmatprep.subr.mxu0 0.0
        %1473 = vmatpush1.msra.mxu0 0.0
        %1474 = vmatprep.subr.mxu0 0.0
        %1475 = vmatpush1.msra.mxu0 0.0
        %1476 = vmatprep.subr.mxu0 0.0
        %1477 = vmatpush1.msra.mxu0 0.0
        %1478 = vmatprep.subr.mxu0 0.0
        %1479 = vmatpush1.msra.mxu0 0.0
        %1480 = vmatprep.subr.mxu0 0.0
        %1481 = vmatpush1.msra.mxu0 0.0
        %1482 = vmatprep.subr.mxu0 0.0
        %1483 = vmatpush1.msra.mxu0 0.0
        %1484 = vmatprep.mubr.f32.mxu0 0.0
        %1485 = vmatmul.mubr.f32.gmra.mrb[0].mxu0 %v1415
        %v1486 = vpop.f32.mrb[0].mxu0
        %v1487 = vadd.f32 %v1407, %v1486
        %v1488 = vpop.f32.mrb[0].mxu0
        %v1489 = vadd.f32 %v1407, %v1488
        %1490 = vmatprep.mubr.f32.mxu0 0.0
        %1491 = vmatmul.mubr.f32.gmra.mrb[0].mxu0 %v1418
        %v1492 = vpop.f32.mrb[0].mxu0
        %v1493 = vadd.f32 %v1412, %v1492
        %v1494 = vpop.f32.mrb[0].mxu0
        %v1495 = vadd.f32 %v1412, %v1494
        %1496 = vdwg.mxu0
        %v1497 = vxor.u32 %v1493, 2147483648
        %v1498 = vxor.u32 %v1495, 2147483648
        %v1499 = vmul.f32 %v1497, 1.442695
        %v1500 = vpow.pop %v1499
        %v1501 = vmul.f32 %v1498, 1.442695
        %v1502 = vpow.pop %v1501
        %v1503 = vadd.f32 %v1500, 1.0
        %v1504 = vadd.f32 %v1502, 1.0
        %v1505 = vrcp.pop %v1503
        %v1506 = vmul.f32 1.0, %v1505
        %v1507 = vrcp.pop %v1504
        %v1508 = vmul.f32 1.0, %v1507
        %v1509 = vmul.f32 %v1487, %v1506
        %v1510 = vmul.f32 %v1489, %v1508
        %v1511 = vadd.f32 %v1047, %v1509
        %v1512 = vadd.f32 %v1048, %v1510
        %1513 = vst [vmem:[%s548] sm:$0xff] %v1511
        %1514 = vst [vmem:[%s548 + $0x8] sm:$0xff] %v1512
        %s1515 = sand.u32 %s282, 1
        %s1516 = scalar_lea.sflag [#allocation4], %s1515
        %s1517 = sand.u32 %s282, 1
        %s1518 = smul.addr %s1517, 16
        %s1519 = scalar_lea.vmem [#allocation7], %s1518
        %s1520 = sand.u32 %s36, 1
        %s1521 = scalar_lea.sflag [#allocation9], %s1520
        %s1522 = sand.u32 %s310, 1
        %s1523 = smul.addr %s1522, 16
        %s1524 = scalar_lea.vmem [#allocation8], %s1523
        %s1525 = sand.u32 %s36, 1
        %s1526 = scalar_lea.sflag [#allocation9], %s1525
        %s1527 = sand.u32 %s338, 1
        %s1528 = smul.addr %s1527, 16
        %s1529 = scalar_lea.vmem [#allocation10], %s1528
        %s1530 = sand.u32 %s366, 1
        %s1531 = scalar_lea.sflag [#allocation12], %s1530
        %s1532 = sand.u32 %s366, 1
        %s1533 = smul.addr %s1532, 16
        %s1534 = scalar_lea.vmem [#allocation11], %s1533
        // Predicated region
        $region69: #{tpu_custom_call.1} parent=59 // pred_check
          %p1535 = pneg %p292
        $region70: #{tpu_custom_call.1} parent=59 // pred_check_branch
          %1537 = sbr.rel (%p1535) target = $region72
        $region71: #{tpu_custom_call.1} parent=59 // pred_region
          %s1538 = smul.u32 2, %s41
          %s1540 = ssub.s32 256, 256
          %1541 = vsyncadd %s1516, %s1540
          %s1542 = smul.addr %s40, 2
          %s1543 = sadd.s32 %s1538, %s1542
          %s1544 = smul.addr %s1543, 128
          %s1545 = scalar_lea.hbm %s10, %s1544
          %s1547 = sshll.u32 %s1519, 4
          %s1548 = int_to_ptr.vmem [resolvable:$true] %s1547
          %1550 = dma.vmem_to_hbm [thread:$0]  %s1548, 256, %s1545, %s1516
        $region72: #{tpu_custom_call.1} parent=59 // pred_fallthru
          _
        // Predicated region
        $region73: #{tpu_custom_call.1} parent=59 // pred_check
          %p1551 = pneg %p320
        $region74: #{tpu_custom_call.1} parent=59 // pred_check_branch
          %1553 = sbr.rel (%p1551) target = $region76
        $region75: #{tpu_custom_call.1} parent=59 // pred_region
          %s1554 = smul.u32 2, %s41
          %s1556 = ssub.s32 256, 256
          %1557 = vsyncadd %s1521, %s1556
          %s1558 = smul.addr %s40, 2
          %s1559 = sadd.s32 %s1554, %s1558
          %s1560 = smul.addr %s1559, 128
          %s1561 = scalar_lea.hbm %s11, %s1560
          %s1563 = sshll.u32 %s1524, 4
          %s1564 = int_to_ptr.vmem [resolvable:$true] %s1563
          %1566 = dma.vmem_to_hbm [thread:$0]  %s1564, 256, %s1561, %s1521
        $region76: #{tpu_custom_call.1} parent=59 // pred_fallthru
          _
        // Predicated region
        $region77: #{tpu_custom_call.1} parent=59 // pred_check
          %p1567 = pneg %p348
        $region78: #{tpu_custom_call.1} parent=59 // pred_check_branch
          %1569 = sbr.rel (%p1567) target = $region80
        $region79: #{tpu_custom_call.1} parent=59 // pred_region
          %s1570 = smul.u32 2, %s41
          %s1572 = ssub.s32 256, 256
          %1573 = vsyncadd %s1526, %s1572
          %s1574 = smul.addr %s40, 2
          %s1575 = sadd.s32 %s1570, %s1574
          %s1576 = smul.addr %s1575, 128
          %s1577 = scalar_lea.hbm %s12, %s1576
          %s1579 = sshll.u32 %s1529, 4
          %s1580 = int_to_ptr.vmem [resolvable:$true] %s1579
          %1582 = dma.vmem_to_hbm [thread:$0]  %s1580, 256, %s1577, %s1526
        $region80: #{tpu_custom_call.1} parent=59 // pred_fallthru
          _
        // Predicated region
        $region81: #{tpu_custom_call.1} parent=59 // pred_check
          %p1583 = pneg %p376
        $region82: #{tpu_custom_call.1} parent=59 // pred_check_branch
          %1585 = sbr.rel (%p1583) target = $region84
        $region83: #{tpu_custom_call.1} parent=59 // pred_region
          %s1586 = smul.u32 2, %s41
          %s1588 = ssub.s32 256, 256
          %1589 = vsyncadd %s1531, %s1588
          %s1590 = smul.addr %s40, 2
          %s1591 = sadd.s32 %s1586, %s1590
          %s1592 = smul.addr %s1591, 128
          %s1593 = scalar_lea.hbm %s13, %s1592
          %s1595 = sshll.u32 %s1534, 4
          %s1596 = int_to_ptr.vmem [resolvable:$true] %s1595
          %1598 = dma.vmem_to_hbm [thread:$0]  %s1596, 256, %s1593, %s1531
        $region84: #{tpu_custom_call.1} parent=59 // pred_fallthru
          _
      $region60: #{tpu_custom_call.1} parent=5 // pred_fallthru
        _
      %p1599 = scmp.le.s32.totalorder 2, %s31
      // Predicated region
      $region85: #{tpu_custom_call.1} parent=5 // pred_check
        %p1600 = pneg %p1599
      $region86: #{tpu_custom_call.1} parent=5 // pred_check_branch
        %1602 = sbr.rel (%p1600) target = $region88
      $region87: #{tpu_custom_call.1} parent=5 // pred_region
        %s1603 = ssub.s32 %s31, 2
        // Predicated region
        $region89: #{tpu_custom_call.1} parent=87 // pred_check
          %p1604 = pneg %p298
        $region90: #{tpu_custom_call.1} parent=87 // pred_check_branch
          %1606 = sbr.rel (%p1604) target = $region92
        $region91: #{tpu_custom_call.1} parent=87 // pred_region
          %s1607 = sand.u32 %s283, 1
          %s1608 = scalar_lea.sflag [#allocation4], %s1607
          %s1609 = sand.u32 %s283, 1
          %s1610 = smul.addr %s1609, 16
          %s1611 = scalar_lea.vmem [#allocation7], %s1610
          %1612 = dma.done %s1608, 256
        $region92: #{tpu_custom_call.1} parent=87 // pred_fallthru
          _
        // Predicated region
        $region93: #{tpu_custom_call.1} parent=87 // pred_check
          %p1613 = pneg %p326
        $region94: #{tpu_custom_call.1} parent=87 // pred_check_branch
          %1615 = sbr.rel (%p1613) target = $region96
        $region95: #{tpu_custom_call.1} parent=87 // pred_region
          %s1616 = sand.u32 %s37, 1
          %s1617 = scalar_lea.sflag [#allocation9], %s1616
          %s1618 = sand.u32 %s311, 1
          %s1619 = smul.addr %s1618, 16
          %s1620 = scalar_lea.vmem [#allocation8], %s1619
          %1621 = dma.done %s1617, 256
        $region96: #{tpu_custom_call.1} parent=87 // pred_fallthru
          _
        // Predicated region
        $region97: #{tpu_custom_call.1} parent=87 // pred_check
          %p1622 = pneg %p354
        $region98: #{tpu_custom_call.1} parent=87 // pred_check_branch
          %1624 = sbr.rel (%p1622) target = $region100
        $region99: #{tpu_custom_call.1} parent=87 // pred_region
          %s1625 = sand.u32 %s37, 1
          %s1626 = scalar_lea.sflag [#allocation9], %s1625
          %s1627 = sand.u32 %s339, 1
          %s1628 = smul.addr %s1627, 16
          %s1629 = scalar_lea.vmem [#allocation10], %s1628
          %1630 = dma.done %s1626, 256
        $region100: #{tpu_custom_call.1} parent=87 // pred_fallthru
          _
        // Predicated region
        $region101: #{tpu_custom_call.1} parent=87 // pred_check
          %p1631 = pneg %p382
        $region102: #{tpu_custom_call.1} parent=87 // pred_check_branch
          %1633 = sbr.rel (%p1631) target = $region104
        $region103: #{tpu_custom_call.1} parent=87 // pred_region
          %s1634 = sand.u32 %s367, 1
          %s1635 = scalar_lea.sflag [#allocation12], %s1634
          %s1636 = sand.u32 %s367, 1
          %s1637 = smul.addr %s1636, 16
          %s1638 = scalar_lea.vmem [#allocation11], %s1637
          %1639 = dma.done %s1635, 256
        $region104: #{tpu_custom_call.1} parent=87 // pred_fallthru
          _
      $region88: #{tpu_custom_call.1} parent=5 // pred_fallthru
        _
    $region6: #{tpu_custom_call.1} parent=1 // loop_footer
      %s35 = sadd.s32 1, %s31
    $region7: #{tpu_custom_call.1} parent=1 // loop_footer_branch
      %30 = sbr.rel target = $region3
    $region8: #{tpu_custom_call.1} parent=1 // loop_exit
      _
    %1640 = vsyncpa [#allocation3], 1
    %s1641 = scalar_lea.sflag [#allocation3], 1
    %1642 = vsyncpa %s1641, 1
    %1643 = vsyncpa [#allocation6], 1
    %1644 = vsyncpa [#allocation4], 1
    %s1645 = scalar_lea.sflag [#allocation4], 1
    %1646 = vsyncpa %s1645, 1
    %1647 = vsyncpa [#allocation9], 1
    %s1648 = scalar_lea.sflag [#allocation9], 1
    %1649 = vsyncpa %s1648, 1
    %1650 = vsyncpa [#allocation12], 1
    %s1651 = scalar_lea.sflag [#allocation12], 1
    %1652 = vsyncpa %s1651, 1

</llo_original>
